<compile_context>
chip_gen: v7x
topology: tpu7x:2x2x1
jax: 0.10.0
libtpu: 0.0.40
codegen_flags: <defaults>
</compile_context>

<pallas_src>
import jax
import jax.numpy as jnp
from jax.experimental import pallas as pl
from jax.experimental.pallas import tpu as pltpu


# ----------------------------------------------------------------------------
# Pallas kernel: one (image, row-band) tile per grid step.
# ----------------------------------------------------------------------------
def bottleneck_kernel(x_ref, top_ref, bot_ref,
                      w1_ref, b1_ref, w2_ref, b2_ref, w3_ref, b3_ref,
                      o_ref):
    _, TH, W, Cin = x_ref.shape
    C1 = w1_ref.shape[1]
    Cout = w3_ref.shape[1]
    WP = ((W + 2 + 7) // 8) * 8          # padded width, sublane (8) aligned
    MP = TH * WP                          # padded-width output positions

    x_band = x_ref[0]                                              # (TH, W, Cin) f32

    # ---- conv1 (1x1, no bias) + bn1 + relu --------------------------------
    # Computed for the band plus its 1-row top/bottom halo; the halo rows are
    # zeros at the image border, so they double as conv2's vertical padding.
    xh = jnp.concatenate([top_ref[0], x_band, bot_ref[0]], axis=0)  # (TH+2, W, Cin)
    xh_bf = xh.astype(jnp.bfloat16).reshape((TH + 2) * W, Cin)
    y1 = jnp.dot(xh_bf, w1_ref[...], preferred_element_type=jnp.float32)
    y1 = jnp.maximum(y1 + b1_ref[...], 0.0)
    y1 = y1.astype(jnp.bfloat16).reshape(TH + 2, W, C1)

    # ---- conv2 (3x3, stride=1, padding=1, no bias) + bn2 + relu -----------
    # Padded-width trick: pad the width once, flatten, and take each of the 9
    # taps as a contiguous sublane-offset slice; slice valid columns once.
    zl = jnp.zeros((TH + 2, 1, C1), jnp.bfloat16)
    zr = jnp.zeros((TH + 2, WP - 1 - W, C1), jnp.bfloat16)
    zb = jnp.zeros((1, WP, C1), jnp.bfloat16)                 # flat-overrun guard
    p = jnp.concatenate([zl, y1, zr], axis=1)                 # (TH+2, WP, C1)
    p = jnp.concatenate([p, zb], axis=0)                      # (TH+3, WP, C1)
    p_flat = p.reshape((TH + 3) * WP, C1)

    acc = None
    for dh in range(3):
        for dw in range(3):
            off = dh * WP + dw
            part = jnp.dot(p_flat[off:off + MP, :], w2_ref[dh, dw],
                           preferred_element_type=jnp.float32)
            acc = part if acc is None else acc + part
    # TODO(synk): for large C1, fuse the three dw taps per dh along the lane
    #             axis into one (MP, 3*C1) x (3*C1, C1) matmul to fill the
    #             256-wide MXU contraction dimension on v6e/v7x.
    y2 = jnp.maximum(acc + b2_ref[...], 0.0)                  # (MP, C1) f32
    y2 = y2.reshape(TH, WP, C1)[:, :W, :]                     # drop padded cols
    y2 = y2.astype(jnp.bfloat16).reshape(TH * W, C1)

    # ---- conv3 (1x1, no bias) + bn3, identity residual, relu --------------
    y3 = jnp.dot(y2, w3_ref[...], preferred_element_type=jnp.float32)
    y3 = y3 + b3_ref[...]
    res = x_band.astype(jnp.float32).reshape(TH * W, Cin)
    out = jnp.maximum(y3 + res, 0.0)
    o_ref[0] = out.reshape(TH, W, Cout).astype(o_ref.dtype)


# ----------------------------------------------------------------------------
# Wrapper
# ----------------------------------------------------------------------------
def bottleneck_forward(x, w1, b1, w2, b2, w3, b3, *, tile_h=8):
    """x: (N, H, W, Cin) NHWC.  w*: BN-scale-folded bf16 weights, b*: f32 biases."""
    N, H, W, Cin = x.shape
    C1 = w1.shape[1]
    Cout = w3.shape[1]
    assert Cin == Cout, "identity residual requires inplanes == planes * expansion"

    TH = tile_h if (H % tile_h == 0) else H
    NB = H // TH

    # Host-prepared 1-row halos (top/bottom neighbour rows of each band; zeros
    # at the image border).  Keeps every BlockSpec plain Blocked (no overlap).
    xb = x.reshape(N, NB, TH, W, Cin)
    zrow = jnp.zeros((N, 1, W, Cin), x.dtype)
    halo_top = jnp.concatenate([zrow, xb[:, :-1, TH - 1]], axis=1)   # (N, NB, W, Cin)
    halo_bot = jnp.concatenate([xb[:, 1:, 0], zrow], axis=1)         # (N, NB, W, Cin)

    def full_spec(shape):
        return pl.BlockSpec(shape, lambda n, b: (0,) * len(shape))

    flops = 2 * N * H * W * (Cin * C1 + 9 * C1 * C1 + C1 * Cout)
    act_bytes = (x.size + halo_top.size + halo_bot.size
                 + N * H * W * Cout) * x.dtype.itemsize
    wgt_bytes = sum(int(a.size) * a.dtype.itemsize
                    for a in (w1, b1, w2, b2, w3, b3))

    return pl.pallas_call(
        bottleneck_kernel,
        out_shape=jax.ShapeDtypeStruct((N, H, W, Cout), x.dtype),
        grid_spec=pltpu.PrefetchScalarGridSpec(
            num_scalar_prefetch=0,
            grid=(N, NB),
            in_specs=[
                pl.BlockSpec((1, TH, W, Cin), lambda n, b: (n, b, 0, 0)),
                pl.BlockSpec((1, 1, W, Cin), lambda n, b: (n, b, 0, 0)),
                pl.BlockSpec((1, 1, W, Cin), lambda n, b: (n, b, 0, 0)),
                full_spec(w1.shape), full_spec(b1.shape),
                full_spec(w2.shape), full_spec(b2.shape),
                full_spec(w3.shape), full_spec(b3.shape),
            ],
            out_specs=pl.BlockSpec((1, TH, W, Cout), lambda n, b: (n, b, 0, 0)),
        ),
        compiler_params=pltpu.CompilerParams(
            dimension_semantics=("parallel", "parallel"),
            vmem_limit_bytes=48 * 1024 * 1024),
        cost_estimate=pl.CostEstimate(
            flops=int(flops), transcendentals=0,
            bytes_accessed=int(act_bytes + wgt_bytes)),
    )(x, halo_top, halo_bot, w1, b1, w2, b2, w3, b3)


# ----------------------------------------------------------------------------
# Parameter construction (deterministic, synthetic) and reference check
# ----------------------------------------------------------------------------
def fold_bn(gamma, beta, mean, var, eps=1e-5):
    scale = gamma / jnp.sqrt(var + eps)
    bias = beta - mean * scale
    return scale[None, :], bias[None, :]          # (1, C) for broadcasting


def make_params(key, inplanes, planes, expansion=4):
    outplanes = planes * expansion
    keys = jax.random.split(key, 16)
    f32 = jnp.float32

    w1 = jax.random.normal(keys[0], (inplanes, planes), f32) * 0.1
    w2 = jax.random.normal(keys[1], (3, 3, planes, planes), f32) * 0.1
    w3 = jax.random.normal(keys[2], (planes, outplanes), f32) * 0.1

    def bn(i, c):
        gamma = jax.random.uniform(keys[3 + 4 * i], (c,), f32, 0.5, 1.5)
        beta = jax.random.normal(keys[4 + 4 * i], (c,), f32) * 0.1
        mean = jax.random.normal(keys[5 + 4 * i], (c,), f32) * 0.1
        var = jax.random.uniform(keys[6 + 4 * i], (c,), f32, 0.5, 1.5)
        return fold_bn(gamma, beta, mean, var)

    s1, b1 = bn(0, planes)
    s2, b2 = bn(1, planes)
    s3, b3 = bn(2, outplanes)
    return w1, s1, b1, w2, s2, b2, w3, s3, b3


def prep_kernel_params(w1, s1, b1, w2, s2, b2, w3, s3, b3):
    """Fold BN scales into the conv weights and cast matmul operands to bf16."""
    w1f = (w1 * s1).astype(jnp.bfloat16)          # scale output columns
    w2f = (w2 * s2[0]).astype(jnp.bfloat16)       # scale HWIO output channel
    w3f = (w3 * s3).astype(jnp.bfloat16)
    return w1f, b1, w2f, b2, w3f, b3


def reference_forward(x, w1, s1, b1, w2, s2, b2, w3, s3, b3):
    """Plain-JAX NHWC f32 reference of the same forward pass."""
    dn = ("NHWC", "HWIO", "NHWC")

    def conv(a, w):
        return jax.lax.conv_general_dilated(
            a, w, window_strides=(1, 1), padding="SAME", dimension_numbers=dn)

    y = conv(x, w1[None, None])           # 1x1
    y = jnp.maximum(y * s1 + b1, 0.0)
    y = conv(y, w2)                       # 3x3, pad 1
    y = jnp.maximum(y * s2 + b2, 0.0)
    y = conv(y, w3[None, None])           # 1x1
    y = y * s3 + b3
    return jnp.maximum(y + x, 0.0)


if __name__ == "__main__":
    # Identity-residual configuration of the module: stride=1, downsample=None,
    # inplanes == planes * expansion.  Channels kept small but non-trivial so
    # the lane dimension is not pure padding.
    N, H, W = 2, 16, 16
    planes = 16
    inplanes = planes * 4                 # 64

    key = jax.random.PRNGKey(0)
    kx, kp = jax.random.split(key)
    x = jax.random.normal(kx, (N, H, W, inplanes), jnp.float32)
    raw_params = make_params(kp, inplanes, planes)

    out = bottleneck_forward(x, *prep_kernel_params(*raw_params), tile_h=8)
    out = jax.block_until_ready(out)

    ref = reference_forward(x, *raw_params)
    assert out.shape == (N, H, W, inplanes)
    max_err = float(jnp.max(jnp.abs(out - ref)))
    # bf16 MXU inputs (f32 accumulation) vs. pure-f32 reference -> loose tol.
    assert jnp.allclose(out, ref, atol=5e-2, rtol=5e-2), max_err

    print("KERNEL_OK")
</pallas_src>

<mosaic_0001>
module attributes {stable_mosaic.version = 11 : i64} {
  func.func @bottleneck_kernel(%arg0: i32, %arg1: i32, %arg2: memref<1x8x16x64xf32, #tpu.memory_space<vmem>>, %arg3: memref<1x1x16x64xf32, #tpu.memory_space<vmem>>, %arg4: memref<1x1x16x64xf32, #tpu.memory_space<vmem>>, %arg5: memref<64x16xbf16, #tpu.memory_space<vmem>>, %arg6: memref<1x16xf32, #tpu.memory_space<vmem>>, %arg7: memref<3x3x16x16xbf16, #tpu.memory_space<vmem>>, %arg8: memref<1x16xf32, #tpu.memory_space<vmem>>, %arg9: memref<16x64xbf16, #tpu.memory_space<vmem>>, %arg10: memref<1x64xf32, #tpu.memory_space<vmem>>, %arg11: memref<1x8x16x64xf32, #tpu.memory_space<vmem>>) attributes {dimension_semantics = [#tpu.dimension_semantics<parallel>, #tpu.dimension_semantics<parallel>], iteration_bounds = array<i64: 2, 2>, scalar_prefetch = 0 : i64, scratch_operands = 0 : i64, tpu.core_type = #tpu.core_type<tc>, window_params = [{transform_indices = @transform_0, window_bounds = array<i64: 1, 8, 16, 64>}, {transform_indices = @transform_1, window_bounds = array<i64: 1, 1, 16, 64>}, {transform_indices = @transform_2, window_bounds = array<i64: 1, 1, 16, 64>}, {pipeline_mode = #tpu.pipeline_mode<synchronous>, transform_indices = @transform_3, window_bounds = array<i64: 64, 16>}, {pipeline_mode = #tpu.pipeline_mode<synchronous>, transform_indices = @transform_4, window_bounds = array<i64: 1, 16>}, {pipeline_mode = #tpu.pipeline_mode<synchronous>, transform_indices = @transform_5, window_bounds = array<i64: 3, 3, 16, 16>}, {pipeline_mode = #tpu.pipeline_mode<synchronous>, transform_indices = @transform_6, window_bounds = array<i64: 1, 16>}, {pipeline_mode = #tpu.pipeline_mode<synchronous>, transform_indices = @transform_7, window_bounds = array<i64: 16, 64>}, {pipeline_mode = #tpu.pipeline_mode<synchronous>, transform_indices = @transform_8, window_bounds = array<i64: 1, 64>}, {transform_indices = @transform_9, window_bounds = array<i64: 1, 8, 16, 64>}]} {
    %c0 = arith.constant 0 : index
    %c0_0 = arith.constant 0 : index
    %c0_1 = arith.constant 0 : index
    %c0_2 = arith.constant 0 : index
    %0 = vector.load %arg2[%c0, %c0_0, %c0_1, %c0_2] : memref<1x8x16x64xf32, #tpu.memory_space<vmem>>, vector<1x8x16x64xf32>
    %1 = vector.shape_cast %0 : vector<1x8x16x64xf32> to vector<8x16x64xf32>
    %c0_3 = arith.constant 0 : index
    %c0_4 = arith.constant 0 : index
    %c0_5 = arith.constant 0 : index
    %c0_6 = arith.constant 0 : index
    %2 = vector.load %arg3[%c0_3, %c0_4, %c0_5, %c0_6] : memref<1x1x16x64xf32, #tpu.memory_space<vmem>>, vector<1x1x16x64xf32>
    %3 = vector.shape_cast %2 : vector<1x1x16x64xf32> to vector<1x16x64xf32>
    %c0_7 = arith.constant 0 : index
    %c0_8 = arith.constant 0 : index
    %c0_9 = arith.constant 0 : index
    %c0_10 = arith.constant 0 : index
    %4 = vector.load %arg4[%c0_7, %c0_8, %c0_9, %c0_10] : memref<1x1x16x64xf32, #tpu.memory_space<vmem>>, vector<1x1x16x64xf32>
    %5 = vector.shape_cast %4 : vector<1x1x16x64xf32> to vector<1x16x64xf32>
    %6 = tpu.concatenate %3, %1, %5 in 0 : vector<1x16x64xf32>, vector<8x16x64xf32>, vector<1x16x64xf32> -> vector<10x16x64xf32>
    %7 = arith.truncf %6 : vector<10x16x64xf32> to vector<10x16x64xbf16>
    %8 = vector.shape_cast %7 : vector<10x16x64xbf16> to vector<160x64xbf16>
    %c0_11 = arith.constant 0 : index
    %c0_12 = arith.constant 0 : index
    %9 = vector.load %arg5[%c0_11, %c0_12] : memref<64x16xbf16, #tpu.memory_space<vmem>>, vector<64x16xbf16>
    %cst = arith.constant dense<0.000000e+00> : vector<160x16xf32>
    %10 = tpu.matmul %8, %9, %cst {dimension_numbers = #tpu.dot_dimension_numbers<[1], [0], [0], [1], [0, 0, 1, 1], [], []>} : vector<160x64xbf16>, vector<64x16xbf16>, vector<160x16xf32> -> vector<160x16xf32>
    %c0_13 = arith.constant 0 : index
    %c0_14 = arith.constant 0 : index
    %11 = vector.load %arg6[%c0_13, %c0_14] : memref<1x16xf32, #tpu.memory_space<vmem>>, vector<1x16xf32>
    %12 = vector.broadcast %11 : vector<1x16xf32> to vector<160x16xf32>
    %13 = arith.addf %10, %12 : vector<160x16xf32>
    %cst_15 = arith.constant 0.000000e+00 : f32
    %14 = vector.broadcast %cst_15 : f32 to vector<160x16xf32>
    %15 = arith.maximumf %13, %14 : vector<160x16xf32>
    %16 = arith.truncf %15 : vector<160x16xf32> to vector<160x16xbf16>
    %17 = vector.shape_cast %16 : vector<160x16xbf16> to vector<10x16x16xbf16>
    %cst_16 = arith.constant 0.000000e+00 : bf16
    %18 = vector.broadcast %cst_16 : bf16 to vector<10x1x16xbf16>
    %cst_17 = arith.constant 0.000000e+00 : bf16
    %19 = vector.broadcast %cst_17 : bf16 to vector<10x7x16xbf16>
    %cst_18 = arith.constant 0.000000e+00 : bf16
    %20 = vector.broadcast %cst_18 : bf16 to vector<1x24x16xbf16>
    %21 = tpu.concatenate %18, %17, %19 in 1 : vector<10x1x16xbf16>, vector<10x16x16xbf16>, vector<10x7x16xbf16> -> vector<10x24x16xbf16>
    %22 = tpu.concatenate %21, %20 in 0 : vector<10x24x16xbf16>, vector<1x24x16xbf16> -> vector<11x24x16xbf16>
    %23 = vector.shape_cast %22 : vector<11x24x16xbf16> to vector<264x16xbf16>
    %24 = vector.extract_strided_slice %23 {offsets = [0, 0], sizes = [192, 16], strides = [1, 1]} : vector<264x16xbf16> to vector<192x16xbf16>
    %c0_19 = arith.constant 0 : index
    %c0_20 = arith.constant 0 : index
    %c0_21 = arith.constant 0 : index
    %c0_22 = arith.constant 0 : index
    %25 = vector.load %arg7[%c0_19, %c0_20, %c0_21, %c0_22] : memref<3x3x16x16xbf16, #tpu.memory_space<vmem>>, vector<1x1x16x16xbf16>
    %26 = vector.shape_cast %25 : vector<1x1x16x16xbf16> to vector<16x16xbf16>
    %cst_23 = arith.constant dense<0.000000e+00> : vector<192x16xf32>
    %27 = tpu.matmul %24, %26, %cst_23 {dimension_numbers = #tpu.dot_dimension_numbers<[1], [0], [0], [1], [0, 0, 1, 1], [], []>} : vector<192x16xbf16>, vector<16x16xbf16>, vector<192x16xf32> -> vector<192x16xf32>
    %28 = vector.extract_strided_slice %23 {offsets = [1, 0], sizes = [192, 16], strides = [1, 1]} : vector<264x16xbf16> to vector<192x16xbf16>
    %c0_24 = arith.constant 0 : index
    %c1 = arith.constant 1 : index
    %c0_25 = arith.constant 0 : index
    %c0_26 = arith.constant 0 : index
    %29 = vector.load %arg7[%c0_24, %c1, %c0_25, %c0_26] : memref<3x3x16x16xbf16, #tpu.memory_space<vmem>>, vector<1x1x16x16xbf16>
    %30 = vector.shape_cast %29 : vector<1x1x16x16xbf16> to vector<16x16xbf16>
    %cst_27 = arith.constant dense<0.000000e+00> : vector<192x16xf32>
    %31 = tpu.matmul %28, %30, %cst_27 {dimension_numbers = #tpu.dot_dimension_numbers<[1], [0], [0], [1], [0, 0, 1, 1], [], []>} : vector<192x16xbf16>, vector<16x16xbf16>, vector<192x16xf32> -> vector<192x16xf32>
    %32 = arith.addf %27, %31 : vector<192x16xf32>
    %33 = vector.extract_strided_slice %23 {offsets = [2, 0], sizes = [192, 16], strides = [1, 1]} : vector<264x16xbf16> to vector<192x16xbf16>
    %c0_28 = arith.constant 0 : index
    %c2 = arith.constant 2 : index
    %c0_29 = arith.constant 0 : index
    %c0_30 = arith.constant 0 : index
    %34 = vector.load %arg7[%c0_28, %c2, %c0_29, %c0_30] : memref<3x3x16x16xbf16, #tpu.memory_space<vmem>>, vector<1x1x16x16xbf16>
    %35 = vector.shape_cast %34 : vector<1x1x16x16xbf16> to vector<16x16xbf16>
    %cst_31 = arith.constant dense<0.000000e+00> : vector<192x16xf32>
    %36 = tpu.matmul %33, %35, %cst_31 {dimension_numbers = #tpu.dot_dimension_numbers<[1], [0], [0], [1], [0, 0, 1, 1], [], []>} : vector<192x16xbf16>, vector<16x16xbf16>, vector<192x16xf32> -> vector<192x16xf32>
    %37 = arith.addf %32, %36 : vector<192x16xf32>
    %38 = vector.extract_strided_slice %23 {offsets = [24, 0], sizes = [192, 16], strides = [1, 1]} : vector<264x16xbf16> to vector<192x16xbf16>
    %c1_32 = arith.constant 1 : index
    %c0_33 = arith.constant 0 : index
    %c0_34 = arith.constant 0 : index
    %c0_35 = arith.constant 0 : index
    %39 = vector.load %arg7[%c1_32, %c0_33, %c0_34, %c0_35] : memref<3x3x16x16xbf16, #tpu.memory_space<vmem>>, vector<1x1x16x16xbf16>
    %40 = vector.shape_cast %39 : vector<1x1x16x16xbf16> to vector<16x16xbf16>
    %cst_36 = arith.constant dense<0.000000e+00> : vector<192x16xf32>
    %41 = tpu.matmul %38, %40, %cst_36 {dimension_numbers = #tpu.dot_dimension_numbers<[1], [0], [0], [1], [0, 0, 1, 1], [], []>} : vector<192x16xbf16>, vector<16x16xbf16>, vector<192x16xf32> -> vector<192x16xf32>
    %42 = arith.addf %37, %41 : vector<192x16xf32>
    %43 = vector.extract_strided_slice %23 {offsets = [25, 0], sizes = [192, 16], strides = [1, 1]} : vector<264x16xbf16> to vector<192x16xbf16>
    %c1_37 = arith.constant 1 : index
    %c1_38 = arith.constant 1 : index
    %c0_39 = arith.constant 0 : index
    %c0_40 = arith.constant 0 : index
    %44 = vector.load %arg7[%c1_37, %c1_38, %c0_39, %c0_40] : memref<3x3x16x16xbf16, #tpu.memory_space<vmem>>, vector<1x1x16x16xbf16>
    %45 = vector.shape_cast %44 : vector<1x1x16x16xbf16> to vector<16x16xbf16>
    %cst_41 = arith.constant dense<0.000000e+00> : vector<192x16xf32>
    %46 = tpu.matmul %43, %45, %cst_41 {dimension_numbers = #tpu.dot_dimension_numbers<[1], [0], [0], [1], [0, 0, 1, 1], [], []>} : vector<192x16xbf16>, vector<16x16xbf16>, vector<192x16xf32> -> vector<192x16xf32>
    %47 = arith.addf %42, %46 : vector<192x16xf32>
    %48 = vector.extract_strided_slice %23 {offsets = [26, 0], sizes = [192, 16], strides = [1, 1]} : vector<264x16xbf16> to vector<192x16xbf16>
    %c1_42 = arith.constant 1 : index
    %c2_43 = arith.constant 2 : index
    %c0_44 = arith.constant 0 : index
    %c0_45 = arith.constant 0 : index
    %49 = vector.load %arg7[%c1_42, %c2_43, %c0_44, %c0_45] : memref<3x3x16x16xbf16, #tpu.memory_space<vmem>>, vector<1x1x16x16xbf16>
    %50 = vector.shape_cast %49 : vector<1x1x16x16xbf16> to vector<16x16xbf16>
    %cst_46 = arith.constant dense<0.000000e+00> : vector<192x16xf32>
    %51 = tpu.matmul %48, %50, %cst_46 {dimension_numbers = #tpu.dot_dimension_numbers<[1], [0], [0], [1], [0, 0, 1, 1], [], []>} : vector<192x16xbf16>, vector<16x16xbf16>, vector<192x16xf32> -> vector<192x16xf32>
    %52 = arith.addf %47, %51 : vector<192x16xf32>
    %53 = vector.extract_strided_slice %23 {offsets = [48, 0], sizes = [192, 16], strides = [1, 1]} : vector<264x16xbf16> to vector<192x16xbf16>
    %c2_47 = arith.constant 2 : index
    %c0_48 = arith.constant 0 : index
    %c0_49 = arith.constant 0 : index
    %c0_50 = arith.constant 0 : index
    %54 = vector.load %arg7[%c2_47, %c0_48, %c0_49, %c0_50] : memref<3x3x16x16xbf16, #tpu.memory_space<vmem>>, vector<1x1x16x16xbf16>
    %55 = vector.shape_cast %54 : vector<1x1x16x16xbf16> to vector<16x16xbf16>
    %cst_51 = arith.constant dense<0.000000e+00> : vector<192x16xf32>
    %56 = tpu.matmul %53, %55, %cst_51 {dimension_numbers = #tpu.dot_dimension_numbers<[1], [0], [0], [1], [0, 0, 1, 1], [], []>} : vector<192x16xbf16>, vector<16x16xbf16>, vector<192x16xf32> -> vector<192x16xf32>
    %57 = arith.addf %52, %56 : vector<192x16xf32>
    %58 = vector.extract_strided_slice %23 {offsets = [49, 0], sizes = [192, 16], strides = [1, 1]} : vector<264x16xbf16> to vector<192x16xbf16>
    %c2_52 = arith.constant 2 : index
    %c1_53 = arith.constant 1 : index
    %c0_54 = arith.constant 0 : index
    %c0_55 = arith.constant 0 : index
    %59 = vector.load %arg7[%c2_52, %c1_53, %c0_54, %c0_55] : memref<3x3x16x16xbf16, #tpu.memory_space<vmem>>, vector<1x1x16x16xbf16>
    %60 = vector.shape_cast %59 : vector<1x1x16x16xbf16> to vector<16x16xbf16>
    %cst_56 = arith.constant dense<0.000000e+00> : vector<192x16xf32>
    %61 = tpu.matmul %58, %60, %cst_56 {dimension_numbers = #tpu.dot_dimension_numbers<[1], [0], [0], [1], [0, 0, 1, 1], [], []>} : vector<192x16xbf16>, vector<16x16xbf16>, vector<192x16xf32> -> vector<192x16xf32>
    %62 = arith.addf %57, %61 : vector<192x16xf32>
    %63 = vector.extract_strided_slice %23 {offsets = [50, 0], sizes = [192, 16], strides = [1, 1]} : vector<264x16xbf16> to vector<192x16xbf16>
    %c2_57 = arith.constant 2 : index
    %c2_58 = arith.constant 2 : index
    %c0_59 = arith.constant 0 : index
    %c0_60 = arith.constant 0 : index
    %64 = vector.load %arg7[%c2_57, %c2_58, %c0_59, %c0_60] : memref<3x3x16x16xbf16, #tpu.memory_space<vmem>>, vector<1x1x16x16xbf16>
    %65 = vector.shape_cast %64 : vector<1x1x16x16xbf16> to vector<16x16xbf16>
    %cst_61 = arith.constant dense<0.000000e+00> : vector<192x16xf32>
    %66 = tpu.matmul %63, %65, %cst_61 {dimension_numbers = #tpu.dot_dimension_numbers<[1], [0], [0], [1], [0, 0, 1, 1], [], []>} : vector<192x16xbf16>, vector<16x16xbf16>, vector<192x16xf32> -> vector<192x16xf32>
    %67 = arith.addf %62, %66 : vector<192x16xf32>
    %c0_62 = arith.constant 0 : index
    %c0_63 = arith.constant 0 : index
    %68 = vector.load %arg8[%c0_62, %c0_63] : memref<1x16xf32, #tpu.memory_space<vmem>>, vector<1x16xf32>
    %69 = vector.broadcast %68 : vector<1x16xf32> to vector<192x16xf32>
    %70 = arith.addf %67, %69 : vector<192x16xf32>
    %cst_64 = arith.constant 0.000000e+00 : f32
    %71 = vector.broadcast %cst_64 : f32 to vector<192x16xf32>
    %72 = arith.maximumf %70, %71 : vector<192x16xf32>
    %73 = vector.shape_cast %72 : vector<192x16xf32> to vector<8x24x16xf32>
    %74 = vector.extract_strided_slice %73 {offsets = [0, 0, 0], sizes = [8, 16, 16], strides = [1, 1, 1]} : vector<8x24x16xf32> to vector<8x16x16xf32>
    %75 = arith.truncf %74 : vector<8x16x16xf32> to vector<8x16x16xbf16>
    %76 = vector.shape_cast %75 : vector<8x16x16xbf16> to vector<128x16xbf16>
    %c0_65 = arith.constant 0 : index
    %c0_66 = arith.constant 0 : index
    %77 = vector.load %arg9[%c0_65, %c0_66] : memref<16x64xbf16, #tpu.memory_space<vmem>>, vector<16x64xbf16>
    %cst_67 = arith.constant dense<0.000000e+00> : vector<128x64xf32>
    %78 = tpu.matmul %76, %77, %cst_67 {dimension_numbers = #tpu.dot_dimension_numbers<[1], [0], [0], [1], [0, 0, 1, 1], [], []>} : vector<128x16xbf16>, vector<16x64xbf16>, vector<128x64xf32> -> vector<128x64xf32>
    %c0_68 = arith.constant 0 : index
    %c0_69 = arith.constant 0 : index
    %79 = vector.load %arg10[%c0_68, %c0_69] : memref<1x64xf32, #tpu.memory_space<vmem>>, vector<1x64xf32>
    %80 = vector.broadcast %79 : vector<1x64xf32> to vector<128x64xf32>
    %81 = arith.addf %78, %80 : vector<128x64xf32>
    %82 = vector.shape_cast %1 : vector<8x16x64xf32> to vector<128x64xf32>
    %83 = arith.addf %81, %82 : vector<128x64xf32>
    %cst_70 = arith.constant 0.000000e+00 : f32
    %84 = vector.broadcast %cst_70 : f32 to vector<128x64xf32>
    %85 = arith.maximumf %83, %84 : vector<128x64xf32>
    %86 = vector.shape_cast %85 : vector<128x64xf32> to vector<8x16x64xf32>
    %c0_71 = arith.constant 0 : index
    %c0_72 = arith.constant 0 : index
    %c0_73 = arith.constant 0 : index
    %c0_74 = arith.constant 0 : index
    %87 = vector.load %arg11[%c0_71, %c0_72, %c0_73, %c0_74] : memref<1x8x16x64xf32, #tpu.memory_space<vmem>>, vector<1x8x16x64xf32>
    %88 = vector.shape_cast %87 : vector<1x8x16x64xf32> to vector<8x16x64xf32>
    %89 = vector.shape_cast %86 : vector<8x16x64xf32> to vector<1x8x16x64xf32>
    tpu.vector_store %arg11[%c0_71, %c0_72, %c0_73, %c0_74], %89 {strides = array<i32>} : memref<1x8x16x64xf32, #tpu.memory_space<vmem>>, vector<1x8x16x64xf32>,
    return
  }
  func.func @transform_0(%arg0: i32, %arg1: i32) -> (i32, i32, i32, i32) {
    %c0_i32 = arith.constant 0 : i32
    %c0_i32_0 = arith.constant 0 : i32
    %c0_i32_1 = arith.constant 0 : i32
    return %arg0, %arg1, %c0_i32, %c0_i32_0 : i32, i32, i32, i32
  }
  func.func @transform_1(%arg0: i32, %arg1: i32) -> (i32, i32, i32, i32) {
    %c0_i32 = arith.constant 0 : i32
    %c0_i32_0 = arith.constant 0 : i32
    %c0_i32_1 = arith.constant 0 : i32
    return %arg0, %arg1, %c0_i32, %c0_i32_0 : i32, i32, i32, i32
  }
  func.func @transform_2(%arg0: i32, %arg1: i32) -> (i32, i32, i32, i32) {
    %c0_i32 = arith.constant 0 : i32
    %c0_i32_0 = arith.constant 0 : i32
    %c0_i32_1 = arith.constant 0 : i32
    return %arg0, %arg1, %c0_i32, %c0_i32_0 : i32, i32, i32, i32
  }
  func.func @transform_3(%arg0: i32, %arg1: i32) -> (i32, i32) {
    %c0_i32 = arith.constant 0 : i32
    %c0_i32_0 = arith.constant 0 : i32
    %c0_i32_1 = arith.constant 0 : i32
    return %c0_i32, %c0_i32_0 : i32, i32
  }
  func.func @transform_4(%arg0: i32, %arg1: i32) -> (i32, i32) {
    %c0_i32 = arith.constant 0 : i32
    %c0_i32_0 = arith.constant 0 : i32
    %c0_i32_1 = arith.constant 0 : i32
    return %c0_i32, %c0_i32_0 : i32, i32
  }
  func.func @transform_5(%arg0: i32, %arg1: i32) -> (i32, i32, i32, i32) {
    %c0_i32 = arith.constant 0 : i32
    %c0_i32_0 = arith.constant 0 : i32
    %c0_i32_1 = arith.constant 0 : i32
    %c0_i32_2 = arith.constant 0 : i32
    %c0_i32_3 = arith.constant 0 : i32
    return %c0_i32, %c0_i32_0, %c0_i32_1, %c0_i32_2 : i32, i32, i32, i32
  }
  func.func @transform_6(%arg0: i32, %arg1: i32) -> (i32, i32) {
    %c0_i32 = arith.constant 0 : i32
    %c0_i32_0 = arith.constant 0 : i32
    %c0_i32_1 = arith.constant 0 : i32
    return %c0_i32, %c0_i32_0 : i32, i32
  }
  func.func @transform_7(%arg0: i32, %arg1: i32) -> (i32, i32) {
    %c0_i32 = arith.constant 0 : i32
    %c0_i32_0 = arith.constant 0 : i32
    %c0_i32_1 = arith.constant 0 : i32
    return %c0_i32, %c0_i32_0 : i32, i32
  }
  func.func @transform_8(%arg0: i32, %arg1: i32) -> (i32, i32) {
    %c0_i32 = arith.constant 0 : i32
    %c0_i32_0 = arith.constant 0 : i32
    %c0_i32_1 = arith.constant 0 : i32
    return %c0_i32, %c0_i32_0 : i32, i32
  }
  func.func @transform_9(%arg0: i32, %arg1: i32) -> (i32, i32, i32, i32) {
    %c0_i32 = arith.constant 0 : i32
    %c0_i32_0 = arith.constant 0 : i32
    %c0_i32_1 = arith.constant 0 : i32
    return %arg0, %arg1, %c0_i32, %c0_i32_0 : i32, i32, i32, i32
  }
}

</mosaic_0001>

<llo_original>
// kernel: tpu_custom_call.1
$region0: #{tpu_custom_call.1}
  #allocation0 [shape = 'u32[]', space=smem, size = 0x4, offset = 0x4, fixed_abs, tag = 'smem constant byte address 0x4 - core index']
  #allocation1 [shape = 'u32[144,128]{1,0:T(1,128)}', space=vmem, size = 0x12000, scoped, tag = 'internal scratch']
  %s0 = inlined_call_operand.hbm [shape: f32[2,16,16,64], index: 0, kind: input, shape index: {}]
  %s1 = inlined_call_operand.hbm [shape: f32[2,2,16,64], index: 1, kind: input, shape index: {}]
  %s2 = inlined_call_operand.hbm [shape: f32[2,2,16,64], index: 2, kind: input, shape index: {}]
  %s3 = inlined_call_operand.vmem [shape: bf16[64,16], index: 3, kind: input, shape index: {}]
  %s4 = inlined_call_operand.vmem [shape: f32[1,16], index: 4, kind: input, shape index: {}]
  %s5 = inlined_call_operand.hbm [shape: bf16[3,3,16,16], index: 5, kind: input, shape index: {}]
  %s6 = inlined_call_operand.vmem [shape: f32[1,16], index: 6, kind: input, shape index: {}]
  %s7 = inlined_call_operand.vmem [shape: bf16[16,64], index: 7, kind: input, shape index: {}]
  %s8 = inlined_call_operand.vmem [shape: f32[1,64], index: 8, kind: input, shape index: {}]
  %s9 = inlined_call_operand.hbm [shape: f32[2,16,16,64], index: 9, kind: output, shape index: {}]
  %s10 = sld [smem:[#allocation0]]
  $region85: #{tpu_custom_call.1} parent=0
    _
  %s12 = ssub.s32 1, %s10
  %s13 = scalar_select 0, %s12, %s10
  $region1: #{tpu_custom_call.1} parent=0
    #allocation2 [shape = 'u8[131072]{0}', space=vmem, size = 0x20000, scoped, tag = 'input window, operand 0']
    #allocation3 [shape = 's32[2]{0}', space=sflag, size = 0x8, scoped, tag = 'scoped memory for tpu_custom_call.1']
    #allocation4 [shape = 's32[2]{0}', space=sflag, size = 0x8, scoped, tag = 'scoped memory for tpu_custom_call.1']
    #allocation5 [shape = 'u8[16384]{0}', space=vmem, size = 0x4000, scoped, tag = 'input window, operand 1']
    #allocation6 [shape = 's32[2]{0}', space=sflag, size = 0x8, scoped, tag = 'scoped memory for tpu_custom_call.1']
    #allocation7 [shape = 'u8[16384]{0}', space=vmem, size = 0x4000, scoped, tag = 'input window, operand 2']
    #allocation8 [shape = 'u8[36864]{0}', space=vmem, size = 0x9000, scoped, tag = 'input window, operand 5, single buffered']
    #allocation9 [shape = 's32[1]{0}', space=sflag, size = 0x4, scoped, tag = 'scoped memory for tpu_custom_call.1']
    #allocation10 [shape = 'u8[131072]{0}', space=vmem, size = 0x20000, scoped, tag = 'output window, operand 0']
    %14 = vsyncpa [#allocation3], 0
    %s15 = scalar_lea.sflag [#allocation3], 1
    %16 = vsyncpa %s15, 0
    %17 = vsyncpa [#allocation6], 0
    %s18 = scalar_lea.sflag [#allocation6], 1
    %19 = vsyncpa %s18, 0
    %20 = vsyncpa [#allocation9], 0
    %21 = vsyncpa [#allocation4], 0
    %s22 = scalar_lea.sflag [#allocation4], 1
    %23 = vsyncpa %s22, 0
    loop: start=0, step=1, limit=6
    $region2: #{tpu_custom_call.1} parent=1 // loop_pre_header
      _
    $region3: #{tpu_custom_call.1} parent=1 // loop_header
      %s25 = sphi 0, %s29
      %p26 = scmp.ge.s32.totalorder %s25, 6
      %s32 = sphi 0, %s44
      %s33 = sphi 0, %s40
      %s34 = sphi 0, %s32
      %s35 = sphi 0, %s33
      %s36 = sphi 0, %s34
      %s37 = sphi 0, %s35
      %s49 = sphi 0, %s51
      %s52 = sphi 0, %s49
      %s53 = sphi 0, %s52
      %s69 = sphi 0, %s53
      %s77 = sphi 0, %s79
      %s80 = sphi 0, %s77
      %s81 = sphi 0, %s80
      %s97 = sphi 0, %s81
      %s105 = sphi 0, %s107
      %s108 = sphi 0, %s105
      %s109 = sphi 0, %s108
      %s125 = sphi 0, %s109
      %s129 = sphi 0, %s129
      %s131 = sphi 0, %s129
      %s132 = sphi 0, %s131
      %s146 = sphi 0, %s132
      %s150 = sphi 0, %s150
      %s152 = sphi 0, %s150
      %s153 = sphi 0, %s152
      %s167 = sphi 0, %s153
      %s171 = sphi 0, %s171
      %s173 = sphi 0, %s171
      %s174 = sphi 0, %s173
      %s188 = sphi 0, %s174
      %s192 = sphi 0, %s192
      %s194 = sphi 0, %s192
      %s195 = sphi 0, %s194
      %s209 = sphi 0, %s195
      %s213 = sphi 0, %s213
      %s215 = sphi 0, %s213
      %s216 = sphi 0, %s215
      %s230 = sphi 0, %s216
      %s234 = sphi 0, %s234
      %s236 = sphi 0, %s234
      %s237 = sphi 0, %s236
      %s251 = sphi 0, %s237
      %s259 = sphi 0, %s261
      %s262 = sphi 0, %s259
      %s263 = sphi 0, %s262
      %s279 = sphi 0, %s263
    $region4: #{tpu_custom_call.1} parent=1 // loop_header_branch
      %28 = sbr.rel (%p26) target = $region8
    $region5: #{tpu_custom_call.1} parent=1 // loop_body
      %s30 = ssub.s32 %s25, 1
      %s31 = ssub.s32 %s25, 2
      %s38 = sadd.s32 1, %s33
      %p39 = scmp.ge.s32.totalorder %s38, 2
      %s40 = scalar_select %p39, 0, %s38
      %s41 = sadd.s32 1, %s32
      %s42 = scalar_select %p39, %s41, %s32
      %p43 = scmp.ge.s32.totalorder %s42, 2
      %s44 = scalar_select %p43, 0, %s42
      %s45 = ssub.s32 %s32, %s44
      %s46 = ssub.s32 %s33, %s40
      %s47 = sor.u32 %s45, %s46
      %p48 = scmp.eq.s32.totalorder %s47, 0
      %s50 = sadd.s32 %s49, 1
      %s51 = scalar_select %p48, %s49, %s50
      %p54 = pneg %p48
      %p55 = scmp.eq.s32.totalorder %s25, 3
      %p56 = por %p54, %p55
      %p57 = scmp.ne.s32.totalorder %s49, %s52
      %p58 = scmp.eq.s32.totalorder %s25, 0
      %p59 = por %p57, %p58
      %p60 = scmp.ne.s32.totalorder %s49, %s52
      %p61 = scmp.eq.s32.totalorder %s30, 3
      %p62 = por %p60, %p61
      %p63 = scmp.ne.s32.totalorder %s52, %s53
      %p64 = scmp.eq.s32.totalorder %s30, 0
      %p65 = por %p63, %p64
      %p66 = scmp.ne.s32.totalorder %s52, %s53
      %p67 = scmp.eq.s32.totalorder %s31, 3
      %p68 = por %p66, %p67
      %p70 = scmp.ne.s32.totalorder %s53, %s69
      %p71 = scmp.eq.s32.totalorder %s31, 0
      %p72 = por %p70, %p71
      %s73 = ssub.s32 %s32, %s44
      %s74 = ssub.s32 %s33, %s40
      %s75 = sor.u32 %s73, %s74
      %p76 = scmp.eq.s32.totalorder %s75, 0
      %s78 = sadd.s32 %s77, 1
      %s79 = scalar_select %p76, %s77, %s78
      %p82 = pneg %p76
      %p83 = scmp.eq.s32.totalorder %s25, 3
      %p84 = por %p82, %p83
      %p85 = scmp.ne.s32.totalorder %s77, %s80
      %p86 = scmp.eq.s32.totalorder %s25, 0
      %p87 = por %p85, %p86
      %p88 = scmp.ne.s32.totalorder %s77, %s80
      %p89 = scmp.eq.s32.totalorder %s30, 3
      %p90 = por %p88, %p89
      %p91 = scmp.ne.s32.totalorder %s80, %s81
      %p92 = scmp.eq.s32.totalorder %s30, 0
      %p93 = por %p91, %p92
      %p94 = scmp.ne.s32.totalorder %s80, %s81
      %p95 = scmp.eq.s32.totalorder %s31, 3
      %p96 = por %p94, %p95
      %p98 = scmp.ne.s32.totalorder %s81, %s97
      %p99 = scmp.eq.s32.totalorder %s31, 0
      %p100 = por %p98, %p99
      %s101 = ssub.s32 %s32, %s44
      %s102 = ssub.s32 %s33, %s40
      %s103 = sor.u32 %s101, %s102
      %p104 = scmp.eq.s32.totalorder %s103, 0
      %s106 = sadd.s32 %s105, 1
      %s107 = scalar_select %p104, %s105, %s106
      %p110 = pneg %p104
      %p111 = scmp.eq.s32.totalorder %s25, 3
      %p112 = por %p110, %p111
      %p113 = scmp.ne.s32.totalorder %s105, %s108
      %p114 = scmp.eq.s32.totalorder %s25, 0
      %p115 = por %p113, %p114
      %p116 = scmp.ne.s32.totalorder %s105, %s108
      %p117 = scmp.eq.s32.totalorder %s30, 3
      %p118 = por %p116, %p117
      %p119 = scmp.ne.s32.totalorder %s108, %s109
      %p120 = scmp.eq.s32.totalorder %s30, 0
      %p121 = por %p119, %p120
      %p122 = scmp.ne.s32.totalorder %s108, %s109
      %p123 = scmp.eq.s32.totalorder %s31, 3
      %p124 = por %p122, %p123
      %p126 = scmp.ne.s32.totalorder %s109, %s125
      %p127 = scmp.eq.s32.totalorder %s31, 0
      %p128 = por %p126, %p127
      %s130 = sadd.s32 %s129, 1
      %p133 = scmp.eq.s32.totalorder %s25, 3
      %p134 = scmp.ne.s32.totalorder %s129, %s131
      %p135 = scmp.eq.s32.totalorder %s25, 0
      %p136 = por %p134, %p135
      %p137 = scmp.ne.s32.totalorder %s129, %s131
      %p138 = scmp.eq.s32.totalorder %s30, 3
      %p139 = por %p137, %p138
      %p140 = scmp.ne.s32.totalorder %s131, %s132
      %p141 = scmp.eq.s32.totalorder %s30, 0
      %p142 = por %p140, %p141
      %p143 = scmp.ne.s32.totalorder %s131, %s132
      %p144 = scmp.eq.s32.totalorder %s31, 3
      %p145 = por %p143, %p144
      %p147 = scmp.ne.s32.totalorder %s132, %s146
      %p148 = scmp.eq.s32.totalorder %s31, 0
      %p149 = por %p147, %p148
      %s151 = sadd.s32 %s150, 1
      %p154 = scmp.eq.s32.totalorder %s25, 3
      %p155 = scmp.ne.s32.totalorder %s150, %s152
      %p156 = scmp.eq.s32.totalorder %s25, 0
      %p157 = por %p155, %p156
      %p158 = scmp.ne.s32.totalorder %s150, %s152
      %p159 = scmp.eq.s32.totalorder %s30, 3
      %p160 = por %p158, %p159
      %p161 = scmp.ne.s32.totalorder %s152, %s153
      %p162 = scmp.eq.s32.totalorder %s30, 0
      %p163 = por %p161, %p162
      %p164 = scmp.ne.s32.totalorder %s152, %s153
      %p165 = scmp.eq.s32.totalorder %s31, 3
      %p166 = por %p164, %p165
      %p168 = scmp.ne.s32.totalorder %s153, %s167
      %p169 = scmp.eq.s32.totalorder %s31, 0
      %p170 = por %p168, %p169
      %s172 = sadd.s32 %s171, 1
      %p175 = scmp.eq.s32.totalorder %s25, 3
      %p176 = scmp.ne.s32.totalorder %s171, %s173
      %p177 = scmp.eq.s32.totalorder %s25, 0
      %p178 = por %p176, %p177
      %p179 = scmp.ne.s32.totalorder %s171, %s173
      %p180 = scmp.eq.s32.totalorder %s30, 3
      %p181 = por %p179, %p180
      %p182 = scmp.ne.s32.totalorder %s173, %s174
      %p183 = scmp.eq.s32.totalorder %s30, 0
      %p184 = por %p182, %p183
      %p185 = scmp.ne.s32.totalorder %s173, %s174
      %p186 = scmp.eq.s32.totalorder %s31, 3
      %p187 = por %p185, %p186
      %p189 = scmp.ne.s32.totalorder %s174, %s188
      %p190 = scmp.eq.s32.totalorder %s31, 0
      %p191 = por %p189, %p190
      %s193 = sadd.s32 %s192, 1
      %p196 = scmp.eq.s32.totalorder %s25, 3
      %p197 = scmp.ne.s32.totalorder %s192, %s194
      %p198 = scmp.eq.s32.totalorder %s25, 0
      %p199 = por %p197, %p198
      %p200 = scmp.ne.s32.totalorder %s192, %s194
      %p201 = scmp.eq.s32.totalorder %s30, 3
      %p202 = por %p200, %p201
      %p203 = scmp.ne.s32.totalorder %s194, %s195
      %p204 = scmp.eq.s32.totalorder %s30, 0
      %p205 = por %p203, %p204
      %p206 = scmp.ne.s32.totalorder %s194, %s195
      %p207 = scmp.eq.s32.totalorder %s31, 3
      %p208 = por %p206, %p207
      %p210 = scmp.ne.s32.totalorder %s195, %s209
      %p211 = scmp.eq.s32.totalorder %s31, 0
      %p212 = por %p210, %p211
      %s214 = sadd.s32 %s213, 1
      %p217 = scmp.eq.s32.totalorder %s25, 3
      %p218 = scmp.ne.s32.totalorder %s213, %s215
      %p219 = scmp.eq.s32.totalorder %s25, 0
      %p220 = por %p218, %p219
      %p221 = scmp.ne.s32.totalorder %s213, %s215
      %p222 = scmp.eq.s32.totalorder %s30, 3
      %p223 = por %p221, %p222
      %p224 = scmp.ne.s32.totalorder %s215, %s216
      %p225 = scmp.eq.s32.totalorder %s30, 0
      %p226 = por %p224, %p225
      %p227 = scmp.ne.s32.totalorder %s215, %s216
      %p228 = scmp.eq.s32.totalorder %s31, 3
      %p229 = por %p227, %p228
      %p231 = scmp.ne.s32.totalorder %s216, %s230
      %p232 = scmp.eq.s32.totalorder %s31, 0
      %p233 = por %p231, %p232
      %s235 = sadd.s32 %s234, 1
      %p238 = scmp.eq.s32.totalorder %s25, 3
      %p239 = scmp.ne.s32.totalorder %s234, %s236
      %p240 = scmp.eq.s32.totalorder %s25, 0
      %p241 = por %p239, %p240
      %p242 = scmp.ne.s32.totalorder %s234, %s236
      %p243 = scmp.eq.s32.totalorder %s30, 3
      %p244 = por %p242, %p243
      %p245 = scmp.ne.s32.totalorder %s236, %s237
      %p246 = scmp.eq.s32.totalorder %s30, 0
      %p247 = por %p245, %p246
      %p248 = scmp.ne.s32.totalorder %s236, %s237
      %p249 = scmp.eq.s32.totalorder %s31, 3
      %p250 = por %p248, %p249
      %p252 = scmp.ne.s32.totalorder %s237, %s251
      %p253 = scmp.eq.s32.totalorder %s31, 0
      %p254 = por %p252, %p253
      %s255 = ssub.s32 %s32, %s44
      %s256 = ssub.s32 %s33, %s40
      %s257 = sor.u32 %s255, %s256
      %p258 = scmp.eq.s32.totalorder %s257, 0
      %s260 = sadd.s32 %s259, 1
      %s261 = scalar_select %p258, %s259, %s260
      %p264 = pneg %p258
      %p265 = scmp.eq.s32.totalorder %s25, 3
      %p266 = por %p264, %p265
      %p267 = scmp.ne.s32.totalorder %s259, %s262
      %p268 = scmp.eq.s32.totalorder %s25, 0
      %p269 = por %p267, %p268
      %p270 = scmp.ne.s32.totalorder %s259, %s262
      %p271 = scmp.eq.s32.totalorder %s30, 3
      %p272 = por %p270, %p271
      %p273 = scmp.ne.s32.totalorder %s262, %s263
      %p274 = scmp.eq.s32.totalorder %s30, 0
      %p275 = por %p273, %p274
      %p276 = scmp.ne.s32.totalorder %s262, %s263
      %p277 = scmp.eq.s32.totalorder %s31, 3
      %p278 = por %p276, %p277
      %p280 = scmp.ne.s32.totalorder %s263, %s279
      %p281 = scmp.eq.s32.totalorder %s31, 0
      %p282 = por %p280, %p281
      %p283 = scmp.le.s32.totalorder 1, %s25
      %p284 = scmp.lt.s32.totalorder %s25, 5
      %p285 = pnand %p283, %p284
      %p286 = pneg %p285
      // Predicated region
      $region9: #{tpu_custom_call.1} parent=5 // pred_check
        _
      $region10: #{tpu_custom_call.1} parent=5 // pred_check_branch
        %288 = sbr.rel (%p285) target = $region12
      $region11: #{tpu_custom_call.1} parent=5 // pred_region
        %s289 = ssub.s32 %s25, 1
        // Predicated region
        $region13: #{tpu_custom_call.1} parent=11 // pred_check
          %p290 = pneg %p142
        $region14: #{tpu_custom_call.1} parent=11 // pred_check_branch
          %292 = sbr.rel (%p290) target = $region16
        $region15: #{tpu_custom_call.1} parent=11 // pred_region
          _
        $region16: #{tpu_custom_call.1} parent=11 // pred_fallthru
          _
        // Predicated region
        $region17: #{tpu_custom_call.1} parent=11 // pred_check
          %p293 = pneg %p163
        $region18: #{tpu_custom_call.1} parent=11 // pred_check_branch
          %295 = sbr.rel (%p293) target = $region20
        $region19: #{tpu_custom_call.1} parent=11 // pred_region
          _
        $region20: #{tpu_custom_call.1} parent=11 // pred_fallthru
          _
        // Predicated region
        $region21: #{tpu_custom_call.1} parent=11 // pred_check
          %p296 = pneg %p184
        $region22: #{tpu_custom_call.1} parent=11 // pred_check_branch
          %298 = sbr.rel (%p296) target = $region24
        $region23: #{tpu_custom_call.1} parent=11 // pred_region
          %s300 = ssub.s32 1152, 1152
          %301 = vsyncadd [#allocation9], %s300
          %s302 = sshll.u32 [#allocation8], 4
          %s303 = int_to_ptr.vmem [resolvable:$true] %s302
          %308 = dma.hbm_to_vmem [thread:$0]  %s5, 1152, %s303, [#allocation9], 64, 64, 4
        $region24: #{tpu_custom_call.1} parent=11 // pred_fallthru
          _
        // Predicated region
        $region25: #{tpu_custom_call.1} parent=11 // pred_check
          %p309 = pneg %p205
        $region26: #{tpu_custom_call.1} parent=11 // pred_check_branch
          %311 = sbr.rel (%p309) target = $region28
        $region27: #{tpu_custom_call.1} parent=11 // pred_region
          _
        $region28: #{tpu_custom_call.1} parent=11 // pred_fallthru
          _
        // Predicated region
        $region29: #{tpu_custom_call.1} parent=11 // pred_check
          %p312 = pneg %p226
        $region30: #{tpu_custom_call.1} parent=11 // pred_check_branch
          %314 = sbr.rel (%p312) target = $region32
        $region31: #{tpu_custom_call.1} parent=11 // pred_region
          _
        $region32: #{tpu_custom_call.1} parent=11 // pred_fallthru
          _
        // Predicated region
        $region33: #{tpu_custom_call.1} parent=11 // pred_check
          %p315 = pneg %p247
        $region34: #{tpu_custom_call.1} parent=11 // pred_check_branch
          %317 = sbr.rel (%p315) target = $region36
        $region35: #{tpu_custom_call.1} parent=11 // pred_region
          _
        $region36: #{tpu_custom_call.1} parent=11 // pred_fallthru
          _
      $region12: #{tpu_custom_call.1} parent=5 // pred_fallthru
        _
      %p318 = scmp.lt.s32.totalorder %s25, 4
      // Predicated region
      $region37: #{tpu_custom_call.1} parent=5 // pred_check
        %p319 = pneg %p318
      $region38: #{tpu_custom_call.1} parent=5 // pred_check_branch
        %321 = sbr.rel (%p319) target = $region40
      $region39: #{tpu_custom_call.1} parent=5 // pred_region
        // Predicated region
        $region41: #{tpu_custom_call.1} parent=39 // pred_check
          %p322 = pneg %p59
        $region42: #{tpu_custom_call.1} parent=39 // pred_check_branch
          %324 = sbr.rel (%p322) target = $region44
        $region43: #{tpu_custom_call.1} parent=39 // pred_region
          %s325 = sand.u32 %s49, 1
          %s326 = scalar_lea.sflag [#allocation3], %s325
          %s327 = sand.u32 %s49, 1
          %s328 = smul.addr %s327, 128
          %s329 = scalar_lea.vmem [#allocation2], %s328
          %s330 = smul.u32 8, %s33
          %s332 = ssub.s32 2048, 2048
          %333 = vsyncadd %s326, %s332
          %s334 = smul.addr %s330, 2
          %s335 = smul.addr %s32, 32
          %s336 = sadd.s32 %s334, %s335
          %s337 = smul.addr %s336, 128
          %s338 = scalar_lea.hbm %s0, %s337
          %s339 = sshll.u32 %s329, 4
          %s340 = int_to_ptr.vmem [resolvable:$true] %s339
          %345 = dma.hbm_to_vmem [thread:$0]  %s338, 2048, %s340, %s326, 128, 128, 8
        $region44: #{tpu_custom_call.1} parent=39 // pred_fallthru
          _
        // Predicated region
        $region45: #{tpu_custom_call.1} parent=39 // pred_check
          %p346 = pneg %p87
        $region46: #{tpu_custom_call.1} parent=39 // pred_check_branch
          %348 = sbr.rel (%p346) target = $region48
        $region47: #{tpu_custom_call.1} parent=39 // pred_region
          %s349 = sand.u32 %s25, 1
          %s350 = scalar_lea.sflag [#allocation6], %s349
          %s351 = sand.u32 %s77, 1
          %s352 = smul.addr %s351, 16
          %s353 = scalar_lea.vmem [#allocation5], %s352
          %s355 = ssub.s32 256, 256
          %356 = vsyncadd %s350, %s355
          %s357 = smul.addr %s33, 2
          %s358 = smul.addr %s32, 4
          %s359 = sadd.s32 %s357, %s358
          %s360 = smul.addr %s359, 128
          %s361 = scalar_lea.hbm %s1, %s360
          %s362 = sshll.u32 %s353, 4
          %s363 = int_to_ptr.vmem [resolvable:$true] %s362
          %368 = dma.hbm_to_vmem [thread:$0]  %s361, 256, %s363, %s350, 128, 128, 8
        $region48: #{tpu_custom_call.1} parent=39 // pred_fallthru
          _
        // Predicated region
        $region49: #{tpu_custom_call.1} parent=39 // pred_check
          %p369 = pneg %p115
        $region50: #{tpu_custom_call.1} parent=39 // pred_check_branch
          %371 = sbr.rel (%p369) target = $region52
        $region51: #{tpu_custom_call.1} parent=39 // pred_region
          %s372 = sand.u32 %s25, 1
          %s373 = scalar_lea.sflag [#allocation6], %s372
          %s374 = sand.u32 %s105, 1
          %s375 = smul.addr %s374, 16
          %s376 = scalar_lea.vmem [#allocation7], %s375
          %s378 = ssub.s32 256, 256
          %379 = vsyncadd %s373, %s378
          %s380 = smul.addr %s33, 2
          %s381 = smul.addr %s32, 4
          %s382 = sadd.s32 %s380, %s381
          %s383 = smul.addr %s382, 128
          %s384 = scalar_lea.hbm %s2, %s383
          %s385 = sshll.u32 %s376, 4
          %s386 = int_to_ptr.vmem [resolvable:$true] %s385
          %391 = dma.hbm_to_vmem [thread:$0]  %s384, 256, %s386, %s373, 128, 128, 8
        $region52: #{tpu_custom_call.1} parent=39 // pred_fallthru
          _
      $region40: #{tpu_custom_call.1} parent=5 // pred_fallthru
        _
      %p392 = scmp.le.s32.totalorder 1, %s25
      %p393 = scmp.lt.s32.totalorder %s25, 5
      %p394 = pnand %p392, %p393
      %p395 = pneg %p394
      // Predicated region
      $region53: #{tpu_custom_call.1} parent=5 // pred_check
        _
      $region54: #{tpu_custom_call.1} parent=5 // pred_check_branch
        %397 = sbr.rel (%p394) target = $region56
      $region55: #{tpu_custom_call.1} parent=5 // pred_region
        %s398 = ssub.s32 %s25, 1
        %s399 = sand.u32 %s52, 1
        %s400 = scalar_lea.sflag [#allocation3], %s399
        %s401 = sand.u32 %s52, 1
        %s402 = smul.addr %s401, 128
        %s403 = scalar_lea.vmem [#allocation2], %s402
        // Predicated region
        $region57: #{tpu_custom_call.1} parent=55 // pred_check
          %p404 = pneg %p65
        $region58: #{tpu_custom_call.1} parent=55 // pred_check_branch
          %406 = sbr.rel (%p404) target = $region60
        $region59: #{tpu_custom_call.1} parent=55 // pred_region
          %407 = dma.done %s400, 2048
        $region60: #{tpu_custom_call.1} parent=55 // pred_fallthru
          _
        %s408 = sand.u32 %s30, 1
        %s409 = scalar_lea.sflag [#allocation6], %s408
        %s410 = sand.u32 %s80, 1
        %s411 = smul.addr %s410, 16
        %s412 = scalar_lea.vmem [#allocation5], %s411
        // Predicated region
        $region61: #{tpu_custom_call.1} parent=55 // pred_check
          %p413 = pneg %p93
        $region62: #{tpu_custom_call.1} parent=55 // pred_check_branch
          %415 = sbr.rel (%p413) target = $region64
        $region63: #{tpu_custom_call.1} parent=55 // pred_region
          %416 = dma.done %s409, 256
        $region64: #{tpu_custom_call.1} parent=55 // pred_fallthru
          _
        %s417 = sand.u32 %s30, 1
        %s418 = scalar_lea.sflag [#allocation6], %s417
        %s419 = sand.u32 %s108, 1
        %s420 = smul.addr %s419, 16
        %s421 = scalar_lea.vmem [#allocation7], %s420
        // Predicated region
        $region65: #{tpu_custom_call.1} parent=55 // pred_check
          %p422 = pneg %p121
        $region66: #{tpu_custom_call.1} parent=55 // pred_check_branch
          %424 = sbr.rel (%p422) target = $region68
        $region67: #{tpu_custom_call.1} parent=55 // pred_region
          %425 = dma.done %s418, 256
        $region68: #{tpu_custom_call.1} parent=55 // pred_fallthru
          _
        // Predicated region
        $region69: #{tpu_custom_call.1} parent=55 // pred_check
          %p426 = pneg %p184
        $region70: #{tpu_custom_call.1} parent=55 // pred_check_branch
          %428 = sbr.rel (%p426) target = $region72
        $region71: #{tpu_custom_call.1} parent=55 // pred_region
          %429 = dma.done [#allocation9], 1152
        $region72: #{tpu_custom_call.1} parent=55 // pred_fallthru
          _
        %s430 = sand.u32 %s52, 1
        %s431 = scalar_lea.sflag [#allocation3], %s430
        %s432 = sand.u32 %s52, 1
        %s433 = smul.addr %s432, 128
        %s434 = scalar_lea.vmem [#allocation2], %s433
        %p435 = pneg %p65
        %p436 = pneg %p62
        %s437 = sand.u32 %s30, 1
        %s438 = scalar_lea.sflag [#allocation6], %s437
        %s439 = sand.u32 %s80, 1
        %s440 = smul.addr %s439, 16
        %s441 = scalar_lea.vmem [#allocation5], %s440
        %p442 = pneg %p93
        %p443 = pneg %p90
        %s444 = sand.u32 %s30, 1
        %s445 = scalar_lea.sflag [#allocation6], %s444
        %s446 = sand.u32 %s108, 1
        %s447 = smul.addr %s446, 16
        %s448 = scalar_lea.vmem [#allocation7], %s447
        %p449 = pneg %p121
        %p450 = pneg %p118
        %p451 = pneg %p142
        %p452 = pneg %p139
        %p453 = pneg %p163
        %p454 = pneg %p160
        %p455 = pneg %p184
        %p456 = pneg %p181
        %p457 = pneg %p205
        %p458 = pneg %p202
        %p459 = pneg %p226
        %p460 = pneg %p223
        %p461 = pneg %p247
        %p462 = pneg %p244
        %p463 = pneg %p275
        %p464 = pneg %p272
        %s465 = sand.u32 %s262, 1
        %s466 = scalar_lea.sflag [#allocation4], %s465
        %s467 = sand.u32 %s262, 1
        %s468 = smul.addr %s467, 128
        %s469 = scalar_lea.vmem [#allocation10], %s468
        %s470 = smul.u32 8, %s35
        %s471 = smul.u32 8, %s35
        %v473 = vld [vmem:[%s403] sm:$0xff]
        %v474 = vld [vmem:[%s403 + $0x8] sm:$0xff]
        %v475 = vld [vmem:[%s403 + $0x10] sm:$0xff]
        %v476 = vld [vmem:[%s403 + $0x18] sm:$0xff]
        %v477 = vld [vmem:[%s403 + $0x20] sm:$0xff]
        %v478 = vld [vmem:[%s403 + $0x28] sm:$0xff]
        %v479 = vld [vmem:[%s403 + $0x30] sm:$0xff]
        %v480 = vld [vmem:[%s403 + $0x38] sm:$0xff]
        %v481 = vld [vmem:[%s403 + $0x40] sm:$0xff]
        %v482 = vld [vmem:[%s403 + $0x48] sm:$0xff]
        %v483 = vld [vmem:[%s403 + $0x50] sm:$0xff]
        %v484 = vld [vmem:[%s403 + $0x58] sm:$0xff]
        %v485 = vld [vmem:[%s403 + $0x60] sm:$0xff]
        %v486 = vld [vmem:[%s403 + $0x68] sm:$0xff]
        %v487 = vld [vmem:[%s403 + $0x70] sm:$0xff]
        %v488 = vld [vmem:[%s403 + $0x78] sm:$0xff]
        %v489 = vld [vmem:[%s412] sm:$0xff]
        %v490 = vld [vmem:[%s412 + $0x8] sm:$0xff]
        %v491 = vld [vmem:[%s421] sm:$0xff]
        %v492 = vld [vmem:[%s421 + $0x8] sm:$0xff]
        %v493 = vpack.c.bf16 %v490, %v489
        %v494 = vpack.c.bf16 %v474, %v473
        %v495 = vpack.c.bf16 %v476, %v475
        %v496 = vpack.c.bf16 %v478, %v477
        %v497 = vpack.c.bf16 %v480, %v479
        %v498 = vpack.c.bf16 %v482, %v481
        %v499 = vpack.c.bf16 %v484, %v483
        %v500 = vpack.c.bf16 %v486, %v485
        %v501 = vpack.c.bf16 %v488, %v487
        %v502 = vpack.c.bf16 %v492, %v491
        %v503 = vld [vmem:[%s3] sm:$0xf]
        %v504 = vld [vmem:[%s3 + $0x4] sm:$0xf]
        %v505 = vld [vmem:[%s3 + $0x8] sm:$0xf]
        %v506 = vld [vmem:[%s3 + $0xc] sm:$0xf]
        %v507 = vld [vmem:[%s3 + $0x10] sm:$0xf]
        %v508 = vld [vmem:[%s3 + $0x14] sm:$0xf]
        %v509 = vld [vmem:[%s3 + $0x18] sm:$0xf]
        %v510 = vld [vmem:[%s3 + $0x1c] sm:$0xf]
        %v511 = vld [vmem:[%s4] sm:$0x1]
        %v513 = vlaneseq
        %v514 = vshrl.u32 %v513, 7
        %v515 = vsub.s32 0, %v514
        %v516 = vrot.slane %v511, %v515
        %v526 = vunpack.c.l.b16 %v503
        %v527 = vunpack.c.l.b16 %v504
        %v528 = vunpack.c.l.b16 %v505
        %v529 = vunpack.c.l.b16 %v506
        %v530 = vunpack.c.l.b16 %v507
        %v531 = vunpack.c.l.b16 %v508
        %v532 = vunpack.c.l.b16 %v509
        %v533 = vunpack.c.l.b16 %v510
        %v534 = vpack.c.b16 %v527, %v526
        %v535 = vpack.c.b16 %v529, %v528
        %v536 = vpack.c.b16 %v531, %v530
        %v537 = vpack.c.b16 %v533, %v532
        %vm542 = vcmask 523264
        %v544 = vsel %vm542, %v493, 0
        %v547 = vsel %vm542, %v494, 0
        %v550 = vsel %vm542, %v495, 0
        %v553 = vsel %vm542, %v496, 0
        %v556 = vsel %vm542, %v497, 0
        %v559 = vsel %vm542, %v498, 0
        %v562 = vsel %vm542, %v499, 0
        %v565 = vsel %vm542, %v500, 0
        %v568 = vsel %vm542, %v501, 0
        %v571 = vsel %vm542, %v502, 0
        %573 = vmatprep.subr.bf16.mxu0 0
        %574 = vmatpush1.bf16.msra.mxu0 %v534
        %575 = vmatprep.subr.bf16.mxu0 0
        %576 = vmatpush1.bf16.msra.mxu0 %v535
        %577 = vmatprep.subr.bf16.mxu0 0
        %578 = vmatpush1.bf16.msra.mxu0 %v536
        %579 = vmatprep.subr.bf16.mxu0 0
        %580 = vmatpush1.bf16.msra.mxu0 %v537
        %581 = vmatprep.subr.bf16.mxu0 0
        %582 = vmatpush1.bf16.msra.mxu0 0
        %583 = vmatprep.subr.bf16.mxu0 0
        %584 = vmatpush1.bf16.msra.mxu0 0
        %585 = vmatprep.subr.bf16.mxu0 0
        %586 = vmatpush1.bf16.msra.mxu0 0
        %587 = vmatprep.subr.bf16.mxu0 0
        %588 = vmatpush1.bf16.msra.mxu0 0
        %589 = vmatprep.subr.bf16.mxu0 0
        %590 = vmatpush1.bf16.msra.mxu0 0
        %591 = vmatprep.subr.bf16.mxu0 0
        %592 = vmatpush1.bf16.msra.mxu0 0
        %593 = vmatprep.subr.bf16.mxu0 0
        %594 = vmatpush1.bf16.msra.mxu0 0
        %595 = vmatprep.subr.bf16.mxu0 0
        %596 = vmatpush1.bf16.msra.mxu0 0
        %597 = vmatprep.subr.bf16.mxu0 0
        %598 = vmatpush1.bf16.msra.mxu0 0
        %599 = vmatprep.subr.bf16.mxu0 0
        %600 = vmatpush1.bf16.msra.mxu0 0
        %601 = vmatprep.subr.bf16.mxu0 0
        %602 = vmatpush1.bf16.msra.mxu0 0
        %603 = vmatprep.subr.bf16.mxu0 0
        %604 = vmatpush1.bf16.msra.mxu0 0
        %605 = vmatprep.mubr.bf16.mxu0 0
        %606 = vmatmul.mubr.bf16.gmra.mrb[0].mxu0 %v544
        %v607 = vpop.f32.mrb[0].mxu0
        %v608 = vadd.f32 %v516, %v607
        %v609 = vpop.f32.mrb[0].mxu0
        %v610 = vpop.f32.mrb[0].mxu0
        %v611 = vadd.f32 %v516, %v610
        %v612 = vpop.f32.mrb[0].mxu0
        %613 = vmatprep.mubr.bf16.mxu0 0
        %614 = vmatmul.mubr.bf16.gmra.mrb[0].mxu0 %v547
        %v615 = vpop.f32.mrb[0].mxu0
        %v616 = vadd.f32 %v516, %v615
        %v617 = vpop.f32.mrb[0].mxu0
        %v618 = vpop.f32.mrb[0].mxu0
        %v619 = vadd.f32 %v516, %v618
        %v620 = vpop.f32.mrb[0].mxu0
        %621 = vmatprep.mubr.bf16.mxu0 0
        %622 = vmatmul.mubr.bf16.gmra.mrb[0].mxu0 %v550
        %v623 = vpop.f32.mrb[0].mxu0
        %v624 = vadd.f32 %v516, %v623
        %v625 = vpop.f32.mrb[0].mxu0
        %v626 = vpop.f32.mrb[0].mxu0
        %v627 = vadd.f32 %v516, %v626
        %v628 = vpop.f32.mrb[0].mxu0
        %629 = vmatprep.mubr.bf16.mxu0 0
        %630 = vmatmul.mubr.bf16.gmra.mrb[0].mxu0 %v553
        %v631 = vpop.f32.mrb[0].mxu0
        %v632 = vadd.f32 %v516, %v631
        %v633 = vpop.f32.mrb[0].mxu0
        %v634 = vpop.f32.mrb[0].mxu0
        %v635 = vadd.f32 %v516, %v634
        %v636 = vpop.f32.mrb[0].mxu0
        %637 = vmatprep.mubr.bf16.mxu0 0
        %638 = vmatmul.mubr.bf16.gmra.mrb[0].mxu0 %v556
        %v639 = vpop.f32.mrb[0].mxu0
        %v640 = vadd.f32 %v516, %v639
        %v641 = vpop.f32.mrb[0].mxu0
        %v642 = vpop.f32.mrb[0].mxu0
        %v643 = vadd.f32 %v516, %v642
        %v644 = vpop.f32.mrb[0].mxu0
        %645 = vmatprep.mubr.bf16.mxu0 0
        %646 = vmatmul.mubr.bf16.gmra.mrb[0].mxu0 %v559
        %v647 = vpop.f32.mrb[0].mxu0
        %v648 = vadd.f32 %v516, %v647
        %v649 = vpop.f32.mrb[0].mxu0
        %v650 = vpop.f32.mrb[0].mxu0
        %v651 = vadd.f32 %v516, %v650
        %v652 = vpop.f32.mrb[0].mxu0
        %653 = vmatprep.mubr.bf16.mxu0 0
        %654 = vmatmul.mubr.bf16.gmra.mrb[0].mxu0 %v562
        %v655 = vpop.f32.mrb[0].mxu0
        %v656 = vadd.f32 %v516, %v655
        %v657 = vpop.f32.mrb[0].mxu0
        %v658 = vpop.f32.mrb[0].mxu0
        %v659 = vadd.f32 %v516, %v658
        %v660 = vpop.f32.mrb[0].mxu0
        %661 = vmatprep.mubr.bf16.mxu0 0
        %662 = vmatmul.mubr.bf16.gmra.mrb[0].mxu0 %v565
        %v663 = vpop.f32.mrb[0].mxu0
        %v664 = vadd.f32 %v516, %v663
        %v665 = vpop.f32.mrb[0].mxu0
        %v666 = vpop.f32.mrb[0].mxu0
        %v667 = vadd.f32 %v516, %v666
        %v668 = vpop.f32.mrb[0].mxu0
        %669 = vmatprep.mubr.bf16.mxu0 0
        %670 = vmatmul.mubr.bf16.gmra.mrb[0].mxu0 %v568
        %v671 = vpop.f32.mrb[0].mxu0
        %v672 = vadd.f32 %v516, %v671
        %v673 = vpop.f32.mrb[0].mxu0
        %v674 = vpop.f32.mrb[0].mxu0
        %v675 = vadd.f32 %v516, %v674
        %v676 = vpop.f32.mrb[0].mxu0
        %677 = vmatprep.mubr.bf16.mxu0 0
        %678 = vmatmul.mubr.bf16.gmra.mrb[0].mxu0 %v571
        %v679 = vpop.f32.mrb[0].mxu0
        %v680 = vadd.f32 %v516, %v679
        %v681 = vpop.f32.mrb[0].mxu0
        %v682 = vpop.f32.mrb[0].mxu0
        %v683 = vadd.f32 %v516, %v682
        %v684 = vpop.f32.mrb[0].mxu0
        %685 = vdwg.mxu0
        %v686 = vmax.f32 %v608, 0.0
        %v687 = vmax.f32 %v611, 0.0
        %v688 = vmax.f32 %v616, 0.0
        %v689 = vmax.f32 %v619, 0.0
        %v690 = vmax.f32 %v624, 0.0
        %v691 = vmax.f32 %v627, 0.0
        %v692 = vmax.f32 %v632, 0.0
        %v693 = vmax.f32 %v635, 0.0
        %v694 = vmax.f32 %v640, 0.0
        %v695 = vmax.f32 %v643, 0.0
        %v696 = vmax.f32 %v648, 0.0
        %v697 = vmax.f32 %v651, 0.0
        %v698 = vmax.f32 %v656, 0.0
        %v699 = vmax.f32 %v659, 0.0
        %v700 = vmax.f32 %v664, 0.0
        %v701 = vmax.f32 %v667, 0.0
        %v702 = vmax.f32 %v672, 0.0
        %v703 = vmax.f32 %v675, 0.0
        %v704 = vmax.f32 %v680, 0.0
        %v705 = vmax.f32 %v683, 0.0
        %v706 = vpack.c.bf16 %v687, %v686
        %v707 = vpack.c.bf16 %v689, %v688
        %v708 = vpack.c.bf16 %v691, %v690
        %v709 = vpack.c.bf16 %v693, %v692
        %v710 = vpack.c.bf16 %v695, %v694
        %v711 = vpack.c.bf16 %v697, %v696
        %v712 = vpack.c.bf16 %v699, %v698
        %v713 = vpack.c.bf16 %v701, %v700
        %v714 = vpack.c.bf16 %v703, %v702
        %v715 = vpack.c.bf16 %v705, %v704
        %v717 = vshrl.u32 %v706, 16
        %v719 = vrot.slane %v717, 7
        %v720 = vshll.u32 %v706, 16
        %v722 = vor.u32 %v719, %v720
        %v724 = vshrl.u32 %v707, 16
        %v726 = vrot.slane %v724, 7
        %v727 = vshll.u32 %v707, 16
        %v729 = vor.u32 %v726, %v727
        %v731 = vshrl.u32 %v708, 16
        %v733 = vrot.slane %v731, 7
        %v734 = vshll.u32 %v708, 16
        %v736 = vor.u32 %v733, %v734
        %v738 = vshrl.u32 %v709, 16
        %v740 = vrot.slane %v738, 7
        %v741 = vshll.u32 %v709, 16
        %v743 = vor.u32 %v740, %v741
        %v745 = vshrl.u32 %v710, 16
        %v747 = vrot.slane %v745, 7
        %v748 = vshll.u32 %v710, 16
        %v750 = vor.u32 %v747, %v748
        %v752 = vshrl.u32 %v711, 16
        %v754 = vrot.slane %v752, 7
        %v755 = vshll.u32 %v711, 16
        %v757 = vor.u32 %v754, %v755
        %v759 = vshrl.u32 %v712, 16
        %v761 = vrot.slane %v759, 7
        %v762 = vshll.u32 %v712, 16
        %v764 = vor.u32 %v761, %v762
        %v766 = vshrl.u32 %v713, 16
        %v768 = vrot.slane %v766, 7
        %v769 = vshll.u32 %v713, 16
        %v771 = vor.u32 %v768, %v769
        %v773 = vshrl.u32 %v714, 16
        %v775 = vrot.slane %v773, 7
        %v776 = vshll.u32 %v714, 16
        %v778 = vor.u32 %v775, %v776
        %v780 = vshrl.u32 %v715, 16
        %v782 = vrot.slane %v780, 7
        %v783 = vshll.u32 %v715, 16
        %v785 = vor.u32 %v782, %v783
        %vm806 = vcmask 1040384
        %vm807 = vsmask.f32 256
        %vm808 = vmand %vm806, %vm807
        %v809 = vsel %vm808, 0, %v722
        %v810 = vsel %vm808, 0, %v729
        %v811 = vsel %vm808, 0, %v736
        %v812 = vsel %vm808, 0, %v743
        %v813 = vsel %vm808, 0, %v750
        %v814 = vsel %vm808, 0, %v757
        %v815 = vsel %vm808, 0, %v764
        %v816 = vsel %vm808, 0, %v771
        %v817 = vsel %vm808, 0, %v778
        %v818 = vsel %vm808, 0, %v785
        %v819 = vsel %vm808, %v719, 0
        %v820 = vsel %vm808, %v726, 0
        %v821 = vsel %vm808, %v733, 0
        %v822 = vsel %vm808, %v740, 0
        %v823 = vsel %vm808, %v747, 0
        %v824 = vsel %vm808, %v754, 0
        %v825 = vsel %vm808, %v761, 0
        %v826 = vsel %vm808, %v768, 0
        %v827 = vsel %vm808, %v775, 0
        %v828 = vsel %vm808, %v782, 0
        %v850 = vunpack.c.l.b16 %v809
        %v851 = vunpack.c.h.b16 %v809
        %v852 = vunpack.c.l.b16 %v819
        %v853 = vunpack.c.l.b16 %v810
        %v854 = vunpack.c.h.b16 %v810
        %v855 = vunpack.c.l.b16 %v820
        %v856 = vunpack.c.l.b16 %v811
        %v857 = vunpack.c.h.b16 %v811
        %v858 = vunpack.c.l.b16 %v821
        %v859 = vunpack.c.l.b16 %v812
        %v860 = vunpack.c.h.b16 %v812
        %v861 = vunpack.c.l.b16 %v822
        %v862 = vunpack.c.l.b16 %v813
        %v863 = vunpack.c.h.b16 %v813
        %v864 = vunpack.c.l.b16 %v823
        %v865 = vunpack.c.l.b16 %v814
        %v866 = vunpack.c.h.b16 %v814
        %v867 = vunpack.c.l.b16 %v824
        %v868 = vunpack.c.l.b16 %v815
        %v869 = vunpack.c.h.b16 %v815
        %v870 = vunpack.c.l.b16 %v825
        %v871 = vunpack.c.l.b16 %v816
        %v872 = vunpack.c.h.b16 %v816
        %v873 = vunpack.c.l.b16 %v826
        %v874 = vunpack.c.l.b16 %v817
        %v875 = vunpack.c.h.b16 %v817
        %v876 = vunpack.c.l.b16 %v827
        %v877 = vunpack.c.l.b16 %v818
        %v878 = vunpack.c.h.b16 %v818
        %v879 = vunpack.c.l.b16 %v828
        %v880 = vunpack.c.l.b16 0
        %v881 = vld [vmem:[#allocation8] sm:$0xf]
        %v882 = vld [vmem:[#allocation8 + $0x4] sm:$0xf]
        %s883 = scalar_lea.vmem [#allocation8], 8
        %v884 = vld [vmem:[%s883] sm:$0xf]
        %v885 = vld [vmem:[%s883 + $0x4] sm:$0xf]
        %v886 = vpack.c.b16 %v851, %v850
        %v887 = vpack.c.b16 %v853, %v852
        %v888 = vpack.c.b16 %v855, %v854
        %v889 = vpack.c.b16 %v857, %v856
        %v890 = vpack.c.b16 %v859, %v858
        %v891 = vpack.c.b16 %v861, %v860
        %v892 = vpack.c.b16 %v863, %v862
        %v893 = vpack.c.b16 %v865, %v864
        %v894 = vpack.c.b16 %v867, %v866
        %v895 = vpack.c.b16 %v869, %v868
        %v896 = vpack.c.b16 %v871, %v870
        %v897 = vpack.c.b16 %v873, %v872
        %v898 = vpack.c.b16 %v874, %v874
        %vm899 = vsmask.f32 7424
        %v901 = vshrl.u32 %v886, 16
        %v903 = vshll.u32 %v886, 16
        %v905 = vrot.slane %v903, 1
        %v906 = vor.u32 %v901, %v905
        %v908 = vshll.u32 %v887, 16
        %v910 = vrot.slane %v908, 1
        %v911 = vsel %vm899, %v906, %v910
        %v912 = vshrl.u32 %v887, 16
        %v914 = vor.u32 %v912, %v910
        %v916 = vshll.u32 %v888, 16
        %v918 = vrot.slane %v916, 1
        %v919 = vsel %vm899, %v914, %v918
        %v920 = vshrl.u32 %v888, 16
        %v922 = vor.u32 %v920, %v918
        %v924 = vshll.u32 %v889, 16
        %v926 = vrot.slane %v924, 1
        %v927 = vsel %vm899, %v922, %v926
        %v928 = vshrl.u32 %v889, 16
        %v930 = vor.u32 %v928, %v926
        %v932 = vshll.u32 %v890, 16
        %v934 = vrot.slane %v932, 1
        %v935 = vsel %vm899, %v930, %v934
        %v936 = vshrl.u32 %v890, 16
        %v938 = vor.u32 %v936, %v934
        %v940 = vshll.u32 %v891, 16
        %v942 = vrot.slane %v940, 1
        %v943 = vsel %vm899, %v938, %v942
        %v944 = vshrl.u32 %v891, 16
        %v946 = vor.u32 %v944, %v942
        %v948 = vshll.u32 %v892, 16
        %v950 = vrot.slane %v948, 1
        %v951 = vsel %vm899, %v946, %v950
        %v952 = vshrl.u32 %v892, 16
        %v954 = vor.u32 %v952, %v950
        %v956 = vshll.u32 %v893, 16
        %v958 = vrot.slane %v956, 1
        %v959 = vsel %vm899, %v954, %v958
        %v960 = vshrl.u32 %v893, 16
        %v962 = vor.u32 %v960, %v958
        %v964 = vshll.u32 %v894, 16
        %v966 = vrot.slane %v964, 1
        %v967 = vsel %vm899, %v962, %v966
        %v968 = vshrl.u32 %v894, 16
        %v970 = vor.u32 %v968, %v966
        %v972 = vshll.u32 %v895, 16
        %v974 = vrot.slane %v972, 1
        %v975 = vsel %vm899, %v970, %v974
        %v976 = vshrl.u32 %v895, 16
        %v978 = vor.u32 %v976, %v974
        %v980 = vshll.u32 %v896, 16
        %v982 = vrot.slane %v980, 1
        %v983 = vsel %vm899, %v978, %v982
        %v984 = vshrl.u32 %v896, 16
        %v986 = vor.u32 %v984, %v982
        %v988 = vshll.u32 %v897, 16
        %v990 = vrot.slane %v988, 1
        %v991 = vsel %vm899, %v986, %v990
        %v992 = vshrl.u32 %v897, 16
        %v994 = vor.u32 %v992, %v990
        %v996 = vshll.u32 %v898, 16
        %v998 = vrot.slane %v996, 1
        %v999 = vsel %vm899, %v994, %v998
        %v1002 = vunpack.c.l.b16 %v884
        %v1003 = vunpack.c.l.b16 %v885
        %v1004 = vpack.c.b16 %v1003, %v1002
        %vm1006 = vcmask 130048
        %v1008 = vsel %vm1006, %v911, 0
        %v1011 = vsel %vm1006, %v919, 0
        %v1014 = vsel %vm1006, %v927, 0
        %v1017 = vsel %vm1006, %v935, 0
        %v1020 = vsel %vm1006, %v943, 0
        %v1023 = vsel %vm1006, %v951, 0
        %v1026 = vsel %vm1006, %v959, 0
        %v1029 = vsel %vm1006, %v967, 0
        %v1032 = vsel %vm1006, %v975, 0
        %v1035 = vsel %vm1006, %v983, 0
        %v1038 = vsel %vm1006, %v991, 0
        %v1041 = vsel %vm1006, %v999, 0
        %1043 = vmatprep.subr.bf16.mxu0 0
        %1044 = vmatpush1.bf16.msra.mxu0 %v1004
        %1045 = vmatprep.subr.bf16.mxu0 0
        %1046 = vmatpush1.bf16.msra.mxu0 0
        %1047 = vmatprep.subr.bf16.mxu0 0
        %1048 = vmatpush1.bf16.msra.mxu0 0
        %1049 = vmatprep.subr.bf16.mxu0 0
        %1050 = vmatpush1.bf16.msra.mxu0 0
        %1051 = vmatprep.subr.bf16.mxu0 0
        %1052 = vmatpush1.bf16.msra.mxu0 0
        %1053 = vmatprep.subr.bf16.mxu0 0
        %1054 = vmatpush1.bf16.msra.mxu0 0
        %1055 = vmatprep.subr.bf16.mxu0 0
        %1056 = vmatpush1.bf16.msra.mxu0 0
        %1057 = vmatprep.subr.bf16.mxu0 0
        %1058 = vmatpush1.bf16.msra.mxu0 0
        %1059 = vmatprep.subr.bf16.mxu0 0
        %1060 = vmatpush1.bf16.msra.mxu0 0
        %1061 = vmatprep.subr.bf16.mxu0 0
        %1062 = vmatpush1.bf16.msra.mxu0 0
        %1063 = vmatprep.subr.bf16.mxu0 0
        %1064 = vmatpush1.bf16.msra.mxu0 0
        %1065 = vmatprep.subr.bf16.mxu0 0
        %1066 = vmatpush1.bf16.msra.mxu0 0
        %1067 = vmatprep.subr.bf16.mxu0 0
        %1068 = vmatpush1.bf16.msra.mxu0 0
        %1069 = vmatprep.subr.bf16.mxu0 0
        %1070 = vmatpush1.bf16.msra.mxu0 0
        %1071 = vmatprep.subr.bf16.mxu0 0
        %1072 = vmatpush1.bf16.msra.mxu0 0
        %1073 = vmatprep.subr.bf16.mxu0 0
        %1074 = vmatpush1.bf16.msra.mxu0 0
        %1075 = vmatprep.mubr.bf16.mxu0 0
        %1076 = vmatmul.mubr.bf16.gmra.mrb[0].mxu0 %v1008
        %v1077 = vpop.f32.mrb[0].mxu0
        %v1078 = vadd.f32 0.0, %v1077
        %v1079 = vpop.f32.mrb[0].mxu0
        %v1080 = vpop.f32.mrb[0].mxu0
        %v1081 = vadd.f32 0.0, %v1080
        %v1082 = vpop.f32.mrb[0].mxu0
        %1083 = vmatprep.mubr.bf16.mxu0 0
        %1084 = vmatmul.mubr.bf16.gmra.mrb[0].mxu0 %v1011
        %v1085 = vpop.f32.mrb[0].mxu0
        %v1086 = vpop.f32.mrb[0].mxu0
        %v1087 = vpop.f32.mrb[0].mxu0
        %v1088 = vadd.f32 0.0, %v1087
        %v1089 = vpop.f32.mrb[0].mxu0
        %1090 = vmatprep.mubr.bf16.mxu0 0
        %1091 = vmatmul.mubr.bf16.gmra.mrb[0].mxu0 %v1014
        %v1092 = vpop.f32.mrb[0].mxu0
        %v1093 = vadd.f32 0.0, %v1092
        %v1094 = vpop.f32.mrb[0].mxu0
        %v1095 = vpop.f32.mrb[0].mxu0
        %v1096 = vpop.f32.mrb[0].mxu0
        %1097 = vmatprep.mubr.bf16.mxu0 0
        %1098 = vmatmul.mubr.bf16.gmra.mrb[0].mxu0 %v1017
        %v1099 = vpop.f32.mrb[0].mxu0
        %v1100 = vadd.f32 0.0, %v1099
        %v1101 = vpop.f32.mrb[0].mxu0
        %v1102 = vpop.f32.mrb[0].mxu0
        %v1103 = vadd.f32 0.0, %v1102
        %v1104 = vpop.f32.mrb[0].mxu0
        %1105 = vmatprep.mubr.bf16.mxu0 0
        %1106 = vmatmul.mubr.bf16.gmra.mrb[0].mxu0 %v1020
        %v1107 = vpop.f32.mrb[0].mxu0
        %v1108 = vpop.f32.mrb[0].mxu0
        %v1109 = vpop.f32.mrb[0].mxu0
        %v1110 = vadd.f32 0.0, %v1109
        %v1111 = vpop.f32.mrb[0].mxu0
        %1112 = vmatprep.mubr.bf16.mxu0 0
        %1113 = vmatmul.mubr.bf16.gmra.mrb[0].mxu0 %v1023
        %v1114 = vpop.f32.mrb[0].mxu0
        %v1115 = vadd.f32 0.0, %v1114
        %v1116 = vpop.f32.mrb[0].mxu0
        %v1117 = vpop.f32.mrb[0].mxu0
        %v1118 = vpop.f32.mrb[0].mxu0
        %1119 = vmatprep.mubr.bf16.mxu0 0
        %1120 = vmatmul.mubr.bf16.gmra.mrb[0].mxu0 %v1026
        %v1121 = vpop.f32.mrb[0].mxu0
        %v1122 = vadd.f32 0.0, %v1121
        %v1123 = vpop.f32.mrb[0].mxu0
        %v1124 = vpop.f32.mrb[0].mxu0
        %v1125 = vadd.f32 0.0, %v1124
        %v1126 = vpop.f32.mrb[0].mxu0
        %1127 = vmatprep.mubr.bf16.mxu0 0
        %1128 = vmatmul.mubr.bf16.gmra.mrb[0].mxu0 %v1029
        %v1129 = vpop.f32.mrb[0].mxu0
        %v1130 = vpop.f32.mrb[0].mxu0
        %v1131 = vpop.f32.mrb[0].mxu0
        %v1132 = vadd.f32 0.0, %v1131
        %v1133 = vpop.f32.mrb[0].mxu0
        %1134 = vmatprep.mubr.bf16.mxu0 0
        %1135 = vmatmul.mubr.bf16.gmra.mrb[0].mxu0 %v1032
        %v1136 = vpop.f32.mrb[0].mxu0
        %v1137 = vadd.f32 0.0, %v1136
        %v1138 = vpop.f32.mrb[0].mxu0
        %v1139 = vpop.f32.mrb[0].mxu0
        %v1140 = vpop.f32.mrb[0].mxu0
        %1141 = vmatprep.mubr.bf16.mxu0 0
        %1142 = vmatmul.mubr.bf16.gmra.mrb[0].mxu0 %v1035
        %v1143 = vpop.f32.mrb[0].mxu0
        %v1144 = vadd.f32 0.0, %v1143
        %v1145 = vpop.f32.mrb[0].mxu0
        %v1146 = vpop.f32.mrb[0].mxu0
        %v1147 = vadd.f32 0.0, %v1146
        %v1148 = vpop.f32.mrb[0].mxu0
        %1149 = vmatprep.mubr.bf16.mxu0 0
        %1150 = vmatmul.mubr.bf16.gmra.mrb[0].mxu0 %v1038
        %v1151 = vpop.f32.mrb[0].mxu0
        %v1152 = vpop.f32.mrb[0].mxu0
        %v1153 = vpop.f32.mrb[0].mxu0
        %v1154 = vadd.f32 0.0, %v1153
        %v1155 = vpop.f32.mrb[0].mxu0
        %1156 = vmatprep.mubr.bf16.mxu0 0
        %1157 = vmatmul.mubr.bf16.gmra.mrb[0].mxu0 %v1041
        %v1158 = vpop.f32.mrb[0].mxu0
        %v1159 = vadd.f32 0.0, %v1158
        %v1160 = vpop.f32.mrb[0].mxu0
        %v1161 = vpop.f32.mrb[0].mxu0
        %v1162 = vpop.f32.mrb[0].mxu0
        %1163 = vdwg.mxu0
        %v1166 = vunpack.c.l.b16 %v881
        %v1167 = vunpack.c.l.b16 %v882
        %v1168 = vpack.c.b16 %v1167, %v1166
        %v1170 = vsel %vm1006, %v886, 0
        %v1172 = vsel %vm1006, %v887, 0
        %v1174 = vsel %vm1006, %v888, 0
        %v1176 = vsel %vm1006, %v889, 0
        %v1178 = vsel %vm1006, %v890, 0
        %v1180 = vsel %vm1006, %v891, 0
        %v1182 = vsel %vm1006, %v892, 0
        %v1184 = vsel %vm1006, %v893, 0
        %v1186 = vsel %vm1006, %v894, 0
        %v1188 = vsel %vm1006, %v895, 0
        %v1190 = vsel %vm1006, %v896, 0
        %v1192 = vsel %vm1006, %v897, 0
        %1194 = vmatprep.subr.bf16.mxu0 0
        %1195 = vmatpush1.bf16.msra.mxu0 %v1168
        %1196 = vmatprep.subr.bf16.mxu0 0
        %1197 = vmatpush1.bf16.msra.mxu0 0
        %1198 = vmatprep.subr.bf16.mxu0 0
        %1199 = vmatpush1.bf16.msra.mxu0 0
        %1200 = vmatprep.subr.bf16.mxu0 0
        %1201 = vmatpush1.bf16.msra.mxu0 0
        %1202 = vmatprep.subr.bf16.mxu0 0
        %1203 = vmatpush1.bf16.msra.mxu0 0
        %1204 = vmatprep.subr.bf16.mxu0 0
        %1205 = vmatpush1.bf16.msra.mxu0 0
        %1206 = vmatprep.subr.bf16.mxu0 0
        %1207 = vmatpush1.bf16.msra.mxu0 0
        %1208 = vmatprep.subr.bf16.mxu0 0
        %1209 = vmatpush1.bf16.msra.mxu0 0
        %1210 = vmatprep.subr.bf16.mxu0 0
        %1211 = vmatpush1.bf16.msra.mxu0 0
        %1212 = vmatprep.subr.bf16.mxu0 0
        %1213 = vmatpush1.bf16.msra.mxu0 0
        %1214 = vmatprep.subr.bf16.mxu0 0
        %1215 = vmatpush1.bf16.msra.mxu0 0
        %1216 = vmatprep.subr.bf16.mxu0 0
        %1217 = vmatpush1.bf16.msra.mxu0 0
        %1218 = vmatprep.subr.bf16.mxu0 0
        %1219 = vmatpush1.bf16.msra.mxu0 0
        %1220 = vmatprep.subr.bf16.mxu0 0
        %1221 = vmatpush1.bf16.msra.mxu0 0
        %1222 = vmatprep.subr.bf16.mxu0 0
        %1223 = vmatpush1.bf16.msra.mxu0 0
        %1224 = vmatprep.subr.bf16.mxu0 0
        %1225 = vmatpush1.bf16.msra.mxu0 0
        %1226 = vmatprep.mubr.bf16.mxu0 0
        %1227 = vmatmul.mubr.bf16.gmra.mrb[0].mxu0 %v1170
        %v1228 = vpop.f32.mrb[0].mxu0
        %v1229 = vadd.f32 %v1078, %v1228
        %v1230 = vpop.f32.mrb[0].mxu0
        %v1231 = vpop.f32.mrb[0].mxu0
        %v1232 = vadd.f32 %v1081, %v1231
        %v1233 = vpop.f32.mrb[0].mxu0
        %1234 = vmatprep.mubr.bf16.mxu0 0
        %1235 = vmatmul.mubr.bf16.gmra.mrb[0].mxu0 %v1172
        %v1236 = vpop.f32.mrb[0].mxu0
        %v1237 = vpop.f32.mrb[0].mxu0
        %v1238 = vpop.f32.mrb[0].mxu0
        %v1239 = vadd.f32 %v1088, %v1238
        %v1240 = vpop.f32.mrb[0].mxu0
        %1241 = vmatprep.mubr.bf16.mxu0 0
        %1242 = vmatmul.mubr.bf16.gmra.mrb[0].mxu0 %v1174
        %v1243 = vpop.f32.mrb[0].mxu0
        %v1244 = vadd.f32 %v1093, %v1243
        %v1245 = vpop.f32.mrb[0].mxu0
        %v1246 = vpop.f32.mrb[0].mxu0
        %v1247 = vpop.f32.mrb[0].mxu0
        %1248 = vmatprep.mubr.bf16.mxu0 0
        %1249 = vmatmul.mubr.bf16.gmra.mrb[0].mxu0 %v1176
        %v1250 = vpop.f32.mrb[0].mxu0
        %v1251 = vadd.f32 %v1100, %v1250
        %v1252 = vpop.f32.mrb[0].mxu0
        %v1253 = vpop.f32.mrb[0].mxu0
        %v1254 = vadd.f32 %v1103, %v1253
        %v1255 = vpop.f32.mrb[0].mxu0
        %1256 = vmatprep.mubr.bf16.mxu0 0
        %1257 = vmatmul.mubr.bf16.gmra.mrb[0].mxu0 %v1178
        %v1258 = vpop.f32.mrb[0].mxu0
        %v1259 = vpop.f32.mrb[0].mxu0
        %v1260 = vpop.f32.mrb[0].mxu0
        %v1261 = vadd.f32 %v1110, %v1260
        %v1262 = vpop.f32.mrb[0].mxu0
        %1263 = vmatprep.mubr.bf16.mxu0 0
        %1264 = vmatmul.mubr.bf16.gmra.mrb[0].mxu0 %v1180
        %v1265 = vpop.f32.mrb[0].mxu0
        %v1266 = vadd.f32 %v1115, %v1265
        %v1267 = vpop.f32.mrb[0].mxu0
        %v1268 = vpop.f32.mrb[0].mxu0
        %v1269 = vpop.f32.mrb[0].mxu0
        %1270 = vmatprep.mubr.bf16.mxu0 0
        %1271 = vmatmul.mubr.bf16.gmra.mrb[0].mxu0 %v1182
        %v1272 = vpop.f32.mrb[0].mxu0
        %v1273 = vadd.f32 %v1122, %v1272
        %v1274 = vpop.f32.mrb[0].mxu0
        %v1275 = vpop.f32.mrb[0].mxu0
        %v1276 = vadd.f32 %v1125, %v1275
        %v1277 = vpop.f32.mrb[0].mxu0
        %1278 = vmatprep.mubr.bf16.mxu0 0
        %1279 = vmatmul.mubr.bf16.gmra.mrb[0].mxu0 %v1184
        %v1280 = vpop.f32.mrb[0].mxu0
        %v1281 = vpop.f32.mrb[0].mxu0
        %v1282 = vpop.f32.mrb[0].mxu0
        %v1283 = vadd.f32 %v1132, %v1282
        %v1284 = vpop.f32.mrb[0].mxu0
        %1285 = vmatprep.mubr.bf16.mxu0 0
        %1286 = vmatmul.mubr.bf16.gmra.mrb[0].mxu0 %v1186
        %v1287 = vpop.f32.mrb[0].mxu0
        %v1288 = vadd.f32 %v1137, %v1287
        %v1289 = vpop.f32.mrb[0].mxu0
        %v1290 = vpop.f32.mrb[0].mxu0
        %v1291 = vpop.f32.mrb[0].mxu0
        %1292 = vmatprep.mubr.bf16.mxu0 0
        %1293 = vmatmul.mubr.bf16.gmra.mrb[0].mxu0 %v1188
        %v1294 = vpop.f32.mrb[0].mxu0
        %v1295 = vadd.f32 %v1144, %v1294
        %v1296 = vpop.f32.mrb[0].mxu0
        %v1297 = vpop.f32.mrb[0].mxu0
        %v1298 = vadd.f32 %v1147, %v1297
        %v1299 = vpop.f32.mrb[0].mxu0
        %1300 = vmatprep.mubr.bf16.mxu0 0
        %1301 = vmatmul.mubr.bf16.gmra.mrb[0].mxu0 %v1190
        %v1302 = vpop.f32.mrb[0].mxu0
        %v1303 = vpop.f32.mrb[0].mxu0
        %v1304 = vpop.f32.mrb[0].mxu0
        %v1305 = vadd.f32 %v1154, %v1304
        %v1306 = vpop.f32.mrb[0].mxu0
        %1307 = vmatprep.mubr.bf16.mxu0 0
        %1308 = vmatmul.mubr.bf16.gmra.mrb[0].mxu0 %v1192
        %v1309 = vpop.f32.mrb[0].mxu0
        %v1310 = vadd.f32 %v1159, %v1309
        %v1311 = vpop.f32.mrb[0].mxu0
        %v1312 = vpop.f32.mrb[0].mxu0
        %v1313 = vpop.f32.mrb[0].mxu0
        %1314 = vdwg.mxu0
        %s1315 = scalar_lea.vmem [#allocation8], 16
        %v1316 = vld [vmem:[%s1315] sm:$0xf]
        %v1317 = vld [vmem:[%s1315 + $0x4] sm:$0xf]
        %vm1318 = vcmask 1046528
        %v1319 = vrot.slane %v886, 1
        %v1320 = vrot.slane %v887, 1
        %v1321 = vsel %vm1318, %v1319, %v1320
        %v1322 = vrot.slane %v888, 1
        %v1323 = vsel %vm1318, %v1320, %v1322
        %v1324 = vrot.slane %v889, 1
        %v1325 = vsel %vm1318, %v1322, %v1324
        %v1326 = vrot.slane %v890, 1
        %v1327 = vsel %vm1318, %v1324, %v1326
        %v1328 = vrot.slane %v891, 1
        %v1329 = vsel %vm1318, %v1326, %v1328
        %v1330 = vrot.slane %v892, 1
        %v1331 = vsel %vm1318, %v1328, %v1330
        %v1332 = vrot.slane %v893, 1
        %v1333 = vsel %vm1318, %v1330, %v1332
        %v1334 = vrot.slane %v894, 1
        %v1335 = vsel %vm1318, %v1332, %v1334
        %v1336 = vrot.slane %v895, 1
        %v1337 = vsel %vm1318, %v1334, %v1336
        %v1338 = vrot.slane %v896, 1
        %v1339 = vsel %vm1318, %v1336, %v1338
        %v1340 = vrot.slane %v897, 1
        %v1341 = vsel %vm1318, %v1338, %v1340
        %v1342 = vrot.slane %v898, 1
        %v1343 = vsel %vm1318, %v1340, %v1342
        %v1346 = vunpack.c.l.b16 %v1316
        %v1347 = vunpack.c.l.b16 %v1317
        %v1348 = vpack.c.b16 %v1347, %v1346
        %v1351 = vsel %vm1006, %v1321, 0
        %v1354 = vsel %vm1006, %v1323, 0
        %v1357 = vsel %vm1006, %v1325, 0
        %v1360 = vsel %vm1006, %v1327, 0
        %v1363 = vsel %vm1006, %v1329, 0
        %v1366 = vsel %vm1006, %v1331, 0
        %v1369 = vsel %vm1006, %v1333, 0
        %v1372 = vsel %vm1006, %v1335, 0
        %v1375 = vsel %vm1006, %v1337, 0
        %v1378 = vsel %vm1006, %v1339, 0
        %v1381 = vsel %vm1006, %v1341, 0
        %v1384 = vsel %vm1006, %v1343, 0
        %1386 = vmatprep.subr.bf16.mxu0 0
        %1387 = vmatpush1.bf16.msra.mxu0 %v1348
        %1388 = vmatprep.subr.bf16.mxu0 0
        %1389 = vmatpush1.bf16.msra.mxu0 0
        %1390 = vmatprep.subr.bf16.mxu0 0
        %1391 = vmatpush1.bf16.msra.mxu0 0
        %1392 = vmatprep.subr.bf16.mxu0 0
        %1393 = vmatpush1.bf16.msra.mxu0 0
        %1394 = vmatprep.subr.bf16.mxu0 0
        %1395 = vmatpush1.bf16.msra.mxu0 0
        %1396 = vmatprep.subr.bf16.mxu0 0
        %1397 = vmatpush1.bf16.msra.mxu0 0
        %1398 = vmatprep.subr.bf16.mxu0 0
        %1399 = vmatpush1.bf16.msra.mxu0 0
        %1400 = vmatprep.subr.bf16.mxu0 0
        %1401 = vmatpush1.bf16.msra.mxu0 0
        %1402 = vmatprep.subr.bf16.mxu0 0
        %1403 = vmatpush1.bf16.msra.mxu0 0
        %1404 = vmatprep.subr.bf16.mxu0 0
        %1405 = vmatpush1.bf16.msra.mxu0 0
        %1406 = vmatprep.subr.bf16.mxu0 0
        %1407 = vmatpush1.bf16.msra.mxu0 0
        %1408 = vmatprep.subr.bf16.mxu0 0
        %1409 = vmatpush1.bf16.msra.mxu0 0
        %1410 = vmatprep.subr.bf16.mxu0 0
        %1411 = vmatpush1.bf16.msra.mxu0 0
        %1412 = vmatprep.subr.bf16.mxu0 0
        %1413 = vmatpush1.bf16.msra.mxu0 0
        %1414 = vmatprep.subr.bf16.mxu0 0
        %1415 = vmatpush1.bf16.msra.mxu0 0
        %1416 = vmatprep.subr.bf16.mxu0 0
        %1417 = vmatpush1.bf16.msra.mxu0 0
        %1418 = vmatprep.mubr.bf16.mxu0 0
        %1419 = vmatmul.mubr.bf16.gmra.mrb[0].mxu0 %v1351
        %v1420 = vpop.f32.mrb[0].mxu0
        %v1421 = vadd.f32 0.0, %v1420
        %v1422 = vpop.f32.mrb[0].mxu0
        %v1423 = vpop.f32.mrb[0].mxu0
        %v1424 = vadd.f32 0.0, %v1423
        %v1425 = vpop.f32.mrb[0].mxu0
        %1426 = vmatprep.mubr.bf16.mxu0 0
        %1427 = vmatmul.mubr.bf16.gmra.mrb[0].mxu0 %v1354
        %v1428 = vpop.f32.mrb[0].mxu0
        %v1429 = vpop.f32.mrb[0].mxu0
        %v1430 = vpop.f32.mrb[0].mxu0
        %v1431 = vadd.f32 0.0, %v1430
        %v1432 = vpop.f32.mrb[0].mxu0
        %1433 = vmatprep.mubr.bf16.mxu0 0
        %1434 = vmatmul.mubr.bf16.gmra.mrb[0].mxu0 %v1357
        %v1435 = vpop.f32.mrb[0].mxu0
        %v1436 = vadd.f32 0.0, %v1435
        %v1437 = vpop.f32.mrb[0].mxu0
        %v1438 = vpop.f32.mrb[0].mxu0
        %v1439 = vpop.f32.mrb[0].mxu0
        %1440 = vmatprep.mubr.bf16.mxu0 0
        %1441 = vmatmul.mubr.bf16.gmra.mrb[0].mxu0 %v1360
        %v1442 = vpop.f32.mrb[0].mxu0
        %v1443 = vadd.f32 0.0, %v1442
        %v1444 = vpop.f32.mrb[0].mxu0
        %v1445 = vpop.f32.mrb[0].mxu0
        %v1446 = vadd.f32 0.0, %v1445
        %v1447 = vpop.f32.mrb[0].mxu0
        %1448 = vmatprep.mubr.bf16.mxu0 0
        %1449 = vmatmul.mubr.bf16.gmra.mrb[0].mxu0 %v1363
        %v1450 = vpop.f32.mrb[0].mxu0
        %v1451 = vpop.f32.mrb[0].mxu0
        %v1452 = vpop.f32.mrb[0].mxu0
        %v1453 = vadd.f32 0.0, %v1452
        %v1454 = vpop.f32.mrb[0].mxu0
        %1455 = vmatprep.mubr.bf16.mxu0 0
        %1456 = vmatmul.mubr.bf16.gmra.mrb[0].mxu0 %v1366
        %v1457 = vpop.f32.mrb[0].mxu0
        %v1458 = vadd.f32 0.0, %v1457
        %v1459 = vpop.f32.mrb[0].mxu0
        %v1460 = vpop.f32.mrb[0].mxu0
        %v1461 = vpop.f32.mrb[0].mxu0
        %1462 = vmatprep.mubr.bf16.mxu0 0
        %1463 = vmatmul.mubr.bf16.gmra.mrb[0].mxu0 %v1369
        %v1464 = vpop.f32.mrb[0].mxu0
        %v1465 = vadd.f32 0.0, %v1464
        %v1466 = vpop.f32.mrb[0].mxu0
        %v1467 = vpop.f32.mrb[0].mxu0
        %v1468 = vadd.f32 0.0, %v1467
        %v1469 = vpop.f32.mrb[0].mxu0
        %1470 = vmatprep.mubr.bf16.mxu0 0
        %1471 = vmatmul.mubr.bf16.gmra.mrb[0].mxu0 %v1372
        %v1472 = vpop.f32.mrb[0].mxu0
        %v1473 = vpop.f32.mrb[0].mxu0
        %v1474 = vpop.f32.mrb[0].mxu0
        %v1475 = vadd.f32 0.0, %v1474
        %v1476 = vpop.f32.mrb[0].mxu0
        %1477 = vmatprep.mubr.bf16.mxu0 0
        %1478 = vmatmul.mubr.bf16.gmra.mrb[0].mxu0 %v1375
        %v1479 = vpop.f32.mrb[0].mxu0
        %v1480 = vadd.f32 0.0, %v1479
        %v1481 = vpop.f32.mrb[0].mxu0
        %v1482 = vpop.f32.mrb[0].mxu0
        %v1483 = vpop.f32.mrb[0].mxu0
        %1484 = vmatprep.mubr.bf16.mxu0 0
        %1485 = vmatmul.mubr.bf16.gmra.mrb[0].mxu0 %v1378
        %v1486 = vpop.f32.mrb[0].mxu0
        %v1487 = vadd.f32 0.0, %v1486
        %v1488 = vpop.f32.mrb[0].mxu0
        %v1489 = vpop.f32.mrb[0].mxu0
        %v1490 = vadd.f32 0.0, %v1489
        %v1491 = vpop.f32.mrb[0].mxu0
        %1492 = vmatprep.mubr.bf16.mxu0 0
        %1493 = vmatmul.mubr.bf16.gmra.mrb[0].mxu0 %v1381
        %v1494 = vpop.f32.mrb[0].mxu0
        %v1495 = vpop.f32.mrb[0].mxu0
        %v1496 = vpop.f32.mrb[0].mxu0
        %v1497 = vadd.f32 0.0, %v1496
        %v1498 = vpop.f32.mrb[0].mxu0
        %1499 = vmatprep.mubr.bf16.mxu0 0
        %1500 = vmatmul.mubr.bf16.gmra.mrb[0].mxu0 %v1384
        %v1501 = vpop.f32.mrb[0].mxu0
        %v1502 = vadd.f32 0.0, %v1501
        %v1503 = vpop.f32.mrb[0].mxu0
        %v1504 = vpop.f32.mrb[0].mxu0
        %v1505 = vpop.f32.mrb[0].mxu0
        %1506 = vdwg.mxu0
        %v1507 = vadd.f32 %v1229, %v1421
        %v1508 = vadd.f32 %v1232, %v1424
        %v1509 = vadd.f32 %v1239, %v1431
        %v1510 = vadd.f32 %v1244, %v1436
        %v1511 = vadd.f32 %v1251, %v1443
        %v1512 = vadd.f32 %v1254, %v1446
        %v1513 = vadd.f32 %v1261, %v1453
        %v1514 = vadd.f32 %v1266, %v1458
        %v1515 = vadd.f32 %v1273, %v1465
        %v1516 = vadd.f32 %v1276, %v1468
        %v1517 = vadd.f32 %v1283, %v1475
        %v1518 = vadd.f32 %v1288, %v1480
        %v1519 = vadd.f32 %v1295, %v1487
        %v1520 = vadd.f32 %v1298, %v1490
        %v1521 = vadd.f32 %v1305, %v1497
        %v1522 = vadd.f32 %v1310, %v1502
        %s1523 = scalar_lea.vmem [#allocation8], 24
        %v1524 = vld [vmem:[%s1523] sm:$0xf]
        %v1525 = vld [vmem:[%s1523 + $0x4] sm:$0xf]
        %v1526 = vpack.c.b16 %v854, %v853
        %v1527 = vpack.c.b16 %v856, %v855
        %v1528 = vpack.c.b16 %v858, %v857
        %v1529 = vpack.c.b16 %v860, %v859
        %v1530 = vpack.c.b16 %v862, %v861
        %v1531 = vpack.c.b16 %v864, %v863
        %v1532 = vpack.c.b16 %v866, %v865
        %v1533 = vpack.c.b16 %v868, %v867
        %v1534 = vpack.c.b16 %v870, %v869
        %v1535 = vpack.c.b16 %v872, %v871
        %v1536 = vpack.c.b16 %v874, %v873
        %v1537 = vpack.c.b16 %v876, %v875
        %v1540 = vunpack.c.l.b16 %v1524
        %v1541 = vunpack.c.l.b16 %v1525
        %v1542 = vpack.c.b16 %v1541, %v1540
        %v1545 = vsel %vm1006, %v1526, 0
        %v1548 = vsel %vm1006, %v1527, 0
        %v1551 = vsel %vm1006, %v1528, 0
        %v1554 = vsel %vm1006, %v1529, 0
        %v1557 = vsel %vm1006, %v1530, 0
        %v1560 = vsel %vm1006, %v1531, 0
        %v1563 = vsel %vm1006, %v1532, 0
        %v1566 = vsel %vm1006, %v1533, 0
        %v1569 = vsel %vm1006, %v1534, 0
        %v1572 = vsel %vm1006, %v1535, 0
        %v1575 = vsel %vm1006, %v1536, 0
        %v1578 = vsel %vm1006, %v1537, 0
        %1580 = vmatprep.subr.bf16.mxu0 0
        %1581 = vmatpush1.bf16.msra.mxu0 %v1542
        %1582 = vmatprep.subr.bf16.mxu0 0
        %1583 = vmatpush1.bf16.msra.mxu0 0
        %1584 = vmatprep.subr.bf16.mxu0 0
        %1585 = vmatpush1.bf16.msra.mxu0 0
        %1586 = vmatprep.subr.bf16.mxu0 0
        %1587 = vmatpush1.bf16.msra.mxu0 0
        %1588 = vmatprep.subr.bf16.mxu0 0
        %1589 = vmatpush1.bf16.msra.mxu0 0
        %1590 = vmatprep.subr.bf16.mxu0 0
        %1591 = vmatpush1.bf16.msra.mxu0 0
        %1592 = vmatprep.subr.bf16.mxu0 0
        %1593 = vmatpush1.bf16.msra.mxu0 0
        %1594 = vmatprep.subr.bf16.mxu0 0
        %1595 = vmatpush1.bf16.msra.mxu0 0
        %1596 = vmatprep.subr.bf16.mxu0 0
        %1597 = vmatpush1.bf16.msra.mxu0 0
        %1598 = vmatprep.subr.bf16.mxu0 0
        %1599 = vmatpush1.bf16.msra.mxu0 0
        %1600 = vmatprep.subr.bf16.mxu0 0
        %1601 = vmatpush1.bf16.msra.mxu0 0
        %1602 = vmatprep.subr.bf16.mxu0 0
        %1603 = vmatpush1.bf16.msra.mxu0 0
        %1604 = vmatprep.subr.bf16.mxu0 0
        %1605 = vmatpush1.bf16.msra.mxu0 0
        %1606 = vmatprep.subr.bf16.mxu0 0
        %1607 = vmatpush1.bf16.msra.mxu0 0
        %1608 = vmatprep.subr.bf16.mxu0 0
        %1609 = vmatpush1.bf16.msra.mxu0 0
        %1610 = vmatprep.subr.bf16.mxu0 0
        %1611 = vmatpush1.bf16.msra.mxu0 0
        %1612 = vmatprep.mubr.bf16.mxu0 0
        %1613 = vmatmul.mubr.bf16.gmra.mrb[0].mxu0 %v1545
        %v1614 = vpop.f32.mrb[0].mxu0
        %v1615 = vadd.f32 0.0, %v1614
        %v1616 = vpop.f32.mrb[0].mxu0
        %v1617 = vpop.f32.mrb[0].mxu0
        %v1618 = vadd.f32 0.0, %v1617
        %v1619 = vpop.f32.mrb[0].mxu0
        %1620 = vmatprep.mubr.bf16.mxu0 0
        %1621 = vmatmul.mubr.bf16.gmra.mrb[0].mxu0 %v1548
        %v1622 = vpop.f32.mrb[0].mxu0
        %v1623 = vpop.f32.mrb[0].mxu0
        %v1624 = vpop.f32.mrb[0].mxu0
        %v1625 = vadd.f32 0.0, %v1624
        %v1626 = vpop.f32.mrb[0].mxu0
        %1627 = vmatprep.mubr.bf16.mxu0 0
        %1628 = vmatmul.mubr.bf16.gmra.mrb[0].mxu0 %v1551
        %v1629 = vpop.f32.mrb[0].mxu0
        %v1630 = vadd.f32 0.0, %v1629
        %v1631 = vpop.f32.mrb[0].mxu0
        %v1632 = vpop.f32.mrb[0].mxu0
        %v1633 = vpop.f32.mrb[0].mxu0
        %1634 = vmatprep.mubr.bf16.mxu0 0
        %1635 = vmatmul.mubr.bf16.gmra.mrb[0].mxu0 %v1554
        %v1636 = vpop.f32.mrb[0].mxu0
        %v1637 = vadd.f32 0.0, %v1636
        %v1638 = vpop.f32.mrb[0].mxu0
        %v1639 = vpop.f32.mrb[0].mxu0
        %v1640 = vadd.f32 0.0, %v1639
        %v1641 = vpop.f32.mrb[0].mxu0
        %1642 = vmatprep.mubr.bf16.mxu0 0
        %1643 = vmatmul.mubr.bf16.gmra.mrb[0].mxu0 %v1557
        %v1644 = vpop.f32.mrb[0].mxu0
        %v1645 = vpop.f32.mrb[0].mxu0
        %v1646 = vpop.f32.mrb[0].mxu0
        %v1647 = vadd.f32 0.0, %v1646
        %v1648 = vpop.f32.mrb[0].mxu0
        %1649 = vmatprep.mubr.bf16.mxu0 0
        %1650 = vmatmul.mubr.bf16.gmra.mrb[0].mxu0 %v1560
        %v1651 = vpop.f32.mrb[0].mxu0
        %v1652 = vadd.f32 0.0, %v1651
        %v1653 = vpop.f32.mrb[0].mxu0
        %v1654 = vpop.f32.mrb[0].mxu0
        %v1655 = vpop.f32.mrb[0].mxu0
        %1656 = vmatprep.mubr.bf16.mxu0 0
        %1657 = vmatmul.mubr.bf16.gmra.mrb[0].mxu0 %v1563
        %v1658 = vpop.f32.mrb[0].mxu0
        %v1659 = vadd.f32 0.0, %v1658
        %v1660 = vpop.f32.mrb[0].mxu0
        %v1661 = vpop.f32.mrb[0].mxu0
        %v1662 = vadd.f32 0.0, %v1661
        %v1663 = vpop.f32.mrb[0].mxu0
        %1664 = vmatprep.mubr.bf16.mxu0 0
        %1665 = vmatmul.mubr.bf16.gmra.mrb[0].mxu0 %v1566
        %v1666 = vpop.f32.mrb[0].mxu0
        %v1667 = vpop.f32.mrb[0].mxu0
        %v1668 = vpop.f32.mrb[0].mxu0
        %v1669 = vadd.f32 0.0, %v1668
        %v1670 = vpop.f32.mrb[0].mxu0
        %1671 = vmatprep.mubr.bf16.mxu0 0
        %1672 = vmatmul.mubr.bf16.gmra.mrb[0].mxu0 %v1569
        %v1673 = vpop.f32.mrb[0].mxu0
        %v1674 = vadd.f32 0.0, %v1673
        %v1675 = vpop.f32.mrb[0].mxu0
        %v1676 = vpop.f32.mrb[0].mxu0
        %v1677 = vpop.f32.mrb[0].mxu0
        %1678 = vmatprep.mubr.bf16.mxu0 0
        %1679 = vmatmul.mubr.bf16.gmra.mrb[0].mxu0 %v1572
        %v1680 = vpop.f32.mrb[0].mxu0
        %v1681 = vadd.f32 0.0, %v1680
        %v1682 = vpop.f32.mrb[0].mxu0
        %v1683 = vpop.f32.mrb[0].mxu0
        %v1684 = vadd.f32 0.0, %v1683
        %v1685 = vpop.f32.mrb[0].mxu0
        %1686 = vmatprep.mubr.bf16.mxu0 0
        %1687 = vmatmul.mubr.bf16.gmra.mrb[0].mxu0 %v1575
        %v1688 = vpop.f32.mrb[0].mxu0
        %v1689 = vpop.f32.mrb[0].mxu0
        %v1690 = vpop.f32.mrb[0].mxu0
        %v1691 = vadd.f32 0.0, %v1690
        %v1692 = vpop.f32.mrb[0].mxu0
        %1693 = vmatprep.mubr.bf16.mxu0 0
        %1694 = vmatmul.mubr.bf16.gmra.mrb[0].mxu0 %v1578
        %v1695 = vpop.f32.mrb[0].mxu0
        %v1696 = vadd.f32 0.0, %v1695
        %v1697 = vpop.f32.mrb[0].mxu0
        %v1698 = vpop.f32.mrb[0].mxu0
        %v1699 = vpop.f32.mrb[0].mxu0
        %1700 = vdwg.mxu0
        %v1701 = vadd.f32 %v1507, %v1615
        %v1702 = vadd.f32 %v1508, %v1618
        %v1703 = vadd.f32 %v1509, %v1625
        %v1704 = vadd.f32 %v1510, %v1630
        %v1705 = vadd.f32 %v1511, %v1637
        %v1706 = vadd.f32 %v1512, %v1640
        %v1707 = vadd.f32 %v1513, %v1647
        %v1708 = vadd.f32 %v1514, %v1652
        %v1709 = vadd.f32 %v1515, %v1659
        %v1710 = vadd.f32 %v1516, %v1662
        %v1711 = vadd.f32 %v1517, %v1669
        %v1712 = vadd.f32 %v1518, %v1674
        %v1713 = vadd.f32 %v1519, %v1681
        %v1714 = vadd.f32 %v1520, %v1684
        %v1715 = vadd.f32 %v1521, %v1691
        %v1716 = vadd.f32 %v1522, %v1696
        %s1717 = scalar_lea.vmem [#allocation8], 32
        %v1718 = vld [vmem:[%s1717] sm:$0xf]
        %v1719 = vld [vmem:[%s1717 + $0x4] sm:$0xf]
        %v1720 = vpack.c.b16 %v877, %v877
        %v1721 = vshrl.u32 %v1526, 16
        %v1723 = vshll.u32 %v1526, 16
        %v1725 = vrot.slane %v1723, 1
        %v1726 = vor.u32 %v1721, %v1725
        %v1727 = vshll.u32 %v1527, 16
        %v1729 = vrot.slane %v1727, 1
        %v1730 = vsel %vm899, %v1726, %v1729
        %v1731 = vshrl.u32 %v1527, 16
        %v1733 = vor.u32 %v1731, %v1729
        %v1734 = vshll.u32 %v1528, 16
        %v1736 = vrot.slane %v1734, 1
        %v1737 = vsel %vm899, %v1733, %v1736
        %v1738 = vshrl.u32 %v1528, 16
        %v1740 = vor.u32 %v1738, %v1736
        %v1741 = vshll.u32 %v1529, 16
        %v1743 = vrot.slane %v1741, 1
        %v1744 = vsel %vm899, %v1740, %v1743
        %v1745 = vshrl.u32 %v1529, 16
        %v1747 = vor.u32 %v1745, %v1743
        %v1748 = vshll.u32 %v1530, 16
        %v1750 = vrot.slane %v1748, 1
        %v1751 = vsel %vm899, %v1747, %v1750
        %v1752 = vshrl.u32 %v1530, 16
        %v1754 = vor.u32 %v1752, %v1750
        %v1755 = vshll.u32 %v1531, 16
        %v1757 = vrot.slane %v1755, 1
        %v1758 = vsel %vm899, %v1754, %v1757
        %v1759 = vshrl.u32 %v1531, 16
        %v1761 = vor.u32 %v1759, %v1757
        %v1762 = vshll.u32 %v1532, 16
        %v1764 = vrot.slane %v1762, 1
        %v1765 = vsel %vm899, %v1761, %v1764
        %v1766 = vshrl.u32 %v1532, 16
        %v1768 = vor.u32 %v1766, %v1764
        %v1769 = vshll.u32 %v1533, 16
        %v1771 = vrot.slane %v1769, 1
        %v1772 = vsel %vm899, %v1768, %v1771
        %v1773 = vshrl.u32 %v1533, 16
        %v1775 = vor.u32 %v1773, %v1771
        %v1776 = vshll.u32 %v1534, 16
        %v1778 = vrot.slane %v1776, 1
        %v1779 = vsel %vm899, %v1775, %v1778
        %v1780 = vshrl.u32 %v1534, 16
        %v1782 = vor.u32 %v1780, %v1778
        %v1783 = vshll.u32 %v1535, 16
        %v1785 = vrot.slane %v1783, 1
        %v1786 = vsel %vm899, %v1782, %v1785
        %v1787 = vshrl.u32 %v1535, 16
        %v1789 = vor.u32 %v1787, %v1785
        %v1790 = vshll.u32 %v1536, 16
        %v1792 = vrot.slane %v1790, 1
        %v1793 = vsel %vm899, %v1789, %v1792
        %v1794 = vshrl.u32 %v1536, 16
        %v1796 = vor.u32 %v1794, %v1792
        %v1797 = vshll.u32 %v1537, 16
        %v1799 = vrot.slane %v1797, 1
        %v1800 = vsel %vm899, %v1796, %v1799
        %v1801 = vshrl.u32 %v1537, 16
        %v1803 = vor.u32 %v1801, %v1799
        %v1805 = vshll.u32 %v1720, 16
        %v1807 = vrot.slane %v1805, 1
        %v1808 = vsel %vm899, %v1803, %v1807
        %v1811 = vunpack.c.l.b16 %v1718
        %v1812 = vunpack.c.l.b16 %v1719
        %v1813 = vpack.c.b16 %v1812, %v1811
        %v1816 = vsel %vm1006, %v1730, 0
        %v1819 = vsel %vm1006, %v1737, 0
        %v1822 = vsel %vm1006, %v1744, 0
        %v1825 = vsel %vm1006, %v1751, 0
        %v1828 = vsel %vm1006, %v1758, 0
        %v1831 = vsel %vm1006, %v1765, 0
        %v1834 = vsel %vm1006, %v1772, 0
        %v1837 = vsel %vm1006, %v1779, 0
        %v1840 = vsel %vm1006, %v1786, 0
        %v1843 = vsel %vm1006, %v1793, 0
        %v1846 = vsel %vm1006, %v1800, 0
        %v1849 = vsel %vm1006, %v1808, 0
        %1851 = vmatprep.subr.bf16.mxu0 0
        %1852 = vmatpush1.bf16.msra.mxu0 %v1813
        %1853 = vmatprep.subr.bf16.mxu0 0
        %1854 = vmatpush1.bf16.msra.mxu0 0
        %1855 = vmatprep.subr.bf16.mxu0 0
        %1856 = vmatpush1.bf16.msra.mxu0 0
        %1857 = vmatprep.subr.bf16.mxu0 0
        %1858 = vmatpush1.bf16.msra.mxu0 0
        %1859 = vmatprep.subr.bf16.mxu0 0
        %1860 = vmatpush1.bf16.msra.mxu0 0
        %1861 = vmatprep.subr.bf16.mxu0 0
        %1862 = vmatpush1.bf16.msra.mxu0 0
        %1863 = vmatprep.subr.bf16.mxu0 0
        %1864 = vmatpush1.bf16.msra.mxu0 0
        %1865 = vmatprep.subr.bf16.mxu0 0
        %1866 = vmatpush1.bf16.msra.mxu0 0
        %1867 = vmatprep.subr.bf16.mxu0 0
        %1868 = vmatpush1.bf16.msra.mxu0 0
        %1869 = vmatprep.subr.bf16.mxu0 0
        %1870 = vmatpush1.bf16.msra.mxu0 0
        %1871 = vmatprep.subr.bf16.mxu0 0
        %1872 = vmatpush1.bf16.msra.mxu0 0
        %1873 = vmatprep.subr.bf16.mxu0 0
        %1874 = vmatpush1.bf16.msra.mxu0 0
        %1875 = vmatprep.subr.bf16.mxu0 0
        %1876 = vmatpush1.bf16.msra.mxu0 0
        %1877 = vmatprep.subr.bf16.mxu0 0
        %1878 = vmatpush1.bf16.msra.mxu0 0
        %1879 = vmatprep.subr.bf16.mxu0 0
        %1880 = vmatpush1.bf16.msra.mxu0 0
        %1881 = vmatprep.subr.bf16.mxu0 0
        %1882 = vmatpush1.bf16.msra.mxu0 0
        %1883 = vmatprep.mubr.bf16.mxu0 0
        %1884 = vmatmul.mubr.bf16.gmra.mrb[0].mxu0 %v1816
        %v1885 = vpop.f32.mrb[0].mxu0
        %v1886 = vadd.f32 0.0, %v1885
        %v1887 = vpop.f32.mrb[0].mxu0
        %v1888 = vpop.f32.mrb[0].mxu0
        %v1889 = vadd.f32 0.0, %v1888
        %v1890 = vpop.f32.mrb[0].mxu0
        %1891 = vmatprep.mubr.bf16.mxu0 0
        %1892 = vmatmul.mubr.bf16.gmra.mrb[0].mxu0 %v1819
        %v1893 = vpop.f32.mrb[0].mxu0
        %v1894 = vpop.f32.mrb[0].mxu0
        %v1895 = vpop.f32.mrb[0].mxu0
        %v1896 = vadd.f32 0.0, %v1895
        %v1897 = vpop.f32.mrb[0].mxu0
        %1898 = vmatprep.mubr.bf16.mxu0 0
        %1899 = vmatmul.mubr.bf16.gmra.mrb[0].mxu0 %v1822
        %v1900 = vpop.f32.mrb[0].mxu0
        %v1901 = vadd.f32 0.0, %v1900
        %v1902 = vpop.f32.mrb[0].mxu0
        %v1903 = vpop.f32.mrb[0].mxu0
        %v1904 = vpop.f32.mrb[0].mxu0
        %1905 = vmatprep.mubr.bf16.mxu0 0
        %1906 = vmatmul.mubr.bf16.gmra.mrb[0].mxu0 %v1825
        %v1907 = vpop.f32.mrb[0].mxu0
        %v1908 = vadd.f32 0.0, %v1907
        %v1909 = vpop.f32.mrb[0].mxu0
        %v1910 = vpop.f32.mrb[0].mxu0
        %v1911 = vadd.f32 0.0, %v1910
        %v1912 = vpop.f32.mrb[0].mxu0
        %1913 = vmatprep.mubr.bf16.mxu0 0
        %1914 = vmatmul.mubr.bf16.gmra.mrb[0].mxu0 %v1828
        %v1915 = vpop.f32.mrb[0].mxu0
        %v1916 = vpop.f32.mrb[0].mxu0
        %v1917 = vpop.f32.mrb[0].mxu0
        %v1918 = vadd.f32 0.0, %v1917
        %v1919 = vpop.f32.mrb[0].mxu0
        %1920 = vmatprep.mubr.bf16.mxu0 0
        %1921 = vmatmul.mubr.bf16.gmra.mrb[0].mxu0 %v1831
        %v1922 = vpop.f32.mrb[0].mxu0
        %v1923 = vadd.f32 0.0, %v1922
        %v1924 = vpop.f32.mrb[0].mxu0
        %v1925 = vpop.f32.mrb[0].mxu0
        %v1926 = vpop.f32.mrb[0].mxu0
        %1927 = vmatprep.mubr.bf16.mxu0 0
        %1928 = vmatmul.mubr.bf16.gmra.mrb[0].mxu0 %v1834
        %v1929 = vpop.f32.mrb[0].mxu0
        %v1930 = vadd.f32 0.0, %v1929
        %v1931 = vpop.f32.mrb[0].mxu0
        %v1932 = vpop.f32.mrb[0].mxu0
        %v1933 = vadd.f32 0.0, %v1932
        %v1934 = vpop.f32.mrb[0].mxu0
        %1935 = vmatprep.mubr.bf16.mxu0 0
        %1936 = vmatmul.mubr.bf16.gmra.mrb[0].mxu0 %v1837
        %v1937 = vpop.f32.mrb[0].mxu0
        %v1938 = vpop.f32.mrb[0].mxu0
        %v1939 = vpop.f32.mrb[0].mxu0
        %v1940 = vadd.f32 0.0, %v1939
        %v1941 = vpop.f32.mrb[0].mxu0
        %1942 = vmatprep.mubr.bf16.mxu0 0
        %1943 = vmatmul.mubr.bf16.gmra.mrb[0].mxu0 %v1840
        %v1944 = vpop.f32.mrb[0].mxu0
        %v1945 = vadd.f32 0.0, %v1944
        %v1946 = vpop.f32.mrb[0].mxu0
        %v1947 = vpop.f32.mrb[0].mxu0
        %v1948 = vpop.f32.mrb[0].mxu0
        %1949 = vmatprep.mubr.bf16.mxu0 0
        %1950 = vmatmul.mubr.bf16.gmra.mrb[0].mxu0 %v1843
        %v1951 = vpop.f32.mrb[0].mxu0
        %v1952 = vadd.f32 0.0, %v1951
        %v1953 = vpop.f32.mrb[0].mxu0
        %v1954 = vpop.f32.mrb[0].mxu0
        %v1955 = vadd.f32 0.0, %v1954
        %v1956 = vpop.f32.mrb[0].mxu0
        %1957 = vmatprep.mubr.bf16.mxu0 0
        %1958 = vmatmul.mubr.bf16.gmra.mrb[0].mxu0 %v1846
        %v1959 = vpop.f32.mrb[0].mxu0
        %v1960 = vpop.f32.mrb[0].mxu0
        %v1961 = vpop.f32.mrb[0].mxu0
        %v1962 = vadd.f32 0.0, %v1961
        %v1963 = vpop.f32.mrb[0].mxu0
        %1964 = vmatprep.mubr.bf16.mxu0 0
        %1965 = vmatmul.mubr.bf16.gmra.mrb[0].mxu0 %v1849
        %v1966 = vpop.f32.mrb[0].mxu0
        %v1967 = vadd.f32 0.0, %v1966
        %v1968 = vpop.f32.mrb[0].mxu0
        %v1969 = vpop.f32.mrb[0].mxu0
        %v1970 = vpop.f32.mrb[0].mxu0
        %1971 = vdwg.mxu0
        %v1972 = vadd.f32 %v1701, %v1886
        %v1973 = vadd.f32 %v1702, %v1889
        %v1974 = vadd.f32 %v1703, %v1896
        %v1975 = vadd.f32 %v1704, %v1901
        %v1976 = vadd.f32 %v1705, %v1908
        %v1977 = vadd.f32 %v1706, %v1911
        %v1978 = vadd.f32 %v1707, %v1918
        %v1979 = vadd.f32 %v1708, %v1923
        %v1980 = vadd.f32 %v1709, %v1930
        %v1981 = vadd.f32 %v1710, %v1933
        %v1982 = vadd.f32 %v1711, %v1940
        %v1983 = vadd.f32 %v1712, %v1945
        %v1984 = vadd.f32 %v1713, %v1952
        %v1985 = vadd.f32 %v1714, %v1955
        %v1986 = vadd.f32 %v1715, %v1962
        %v1987 = vadd.f32 %v1716, %v1967
        %s1988 = scalar_lea.vmem [#allocation8], 40
        %v1989 = vld [vmem:[%s1988] sm:$0xf]
        %v1990 = vld [vmem:[%s1988 + $0x4] sm:$0xf]
        %v1991 = vrot.slane %v1526, 1
        %v1992 = vrot.slane %v1527, 1
        %v1993 = vsel %vm1318, %v1991, %v1992
        %v1994 = vrot.slane %v1528, 1
        %v1995 = vsel %vm1318, %v1992, %v1994
        %v1996 = vrot.slane %v1529, 1
        %v1997 = vsel %vm1318, %v1994, %v1996
        %v1998 = vrot.slane %v1530, 1
        %v1999 = vsel %vm1318, %v1996, %v1998
        %v2000 = vrot.slane %v1531, 1
        %v2001 = vsel %vm1318, %v1998, %v2000
        %v2002 = vrot.slane %v1532, 1
        %v2003 = vsel %vm1318, %v2000, %v2002
        %v2004 = vrot.slane %v1533, 1
        %v2005 = vsel %vm1318, %v2002, %v2004
        %v2006 = vrot.slane %v1534, 1
        %v2007 = vsel %vm1318, %v2004, %v2006
        %v2008 = vrot.slane %v1535, 1
        %v2009 = vsel %vm1318, %v2006, %v2008
        %v2010 = vrot.slane %v1536, 1
        %v2011 = vsel %vm1318, %v2008, %v2010
        %v2012 = vrot.slane %v1537, 1
        %v2013 = vsel %vm1318, %v2010, %v2012
        %v2014 = vrot.slane %v1720, 1
        %v2015 = vsel %vm1318, %v2012, %v2014
        %v2018 = vunpack.c.l.b16 %v1989
        %v2019 = vunpack.c.l.b16 %v1990
        %v2020 = vpack.c.b16 %v2019, %v2018
        %v2023 = vsel %vm1006, %v1993, 0
        %v2026 = vsel %vm1006, %v1995, 0
        %v2029 = vsel %vm1006, %v1997, 0
        %v2032 = vsel %vm1006, %v1999, 0
        %v2035 = vsel %vm1006, %v2001, 0
        %v2038 = vsel %vm1006, %v2003, 0
        %v2041 = vsel %vm1006, %v2005, 0
        %v2044 = vsel %vm1006, %v2007, 0
        %v2047 = vsel %vm1006, %v2009, 0
        %v2050 = vsel %vm1006, %v2011, 0
        %v2053 = vsel %vm1006, %v2013, 0
        %v2056 = vsel %vm1006, %v2015, 0
        %2058 = vmatprep.subr.bf16.mxu0 0
        %2059 = vmatpush1.bf16.msra.mxu0 %v2020
        %2060 = vmatprep.subr.bf16.mxu0 0
        %2061 = vmatpush1.bf16.msra.mxu0 0
        %2062 = vmatprep.subr.bf16.mxu0 0
        %2063 = vmatpush1.bf16.msra.mxu0 0
        %2064 = vmatprep.subr.bf16.mxu0 0
        %2065 = vmatpush1.bf16.msra.mxu0 0
        %2066 = vmatprep.subr.bf16.mxu0 0
        %2067 = vmatpush1.bf16.msra.mxu0 0
        %2068 = vmatprep.subr.bf16.mxu0 0
        %2069 = vmatpush1.bf16.msra.mxu0 0
        %2070 = vmatprep.subr.bf16.mxu0 0
        %2071 = vmatpush1.bf16.msra.mxu0 0
        %2072 = vmatprep.subr.bf16.mxu0 0
        %2073 = vmatpush1.bf16.msra.mxu0 0
        %2074 = vmatprep.subr.bf16.mxu0 0
        %2075 = vmatpush1.bf16.msra.mxu0 0
        %2076 = vmatprep.subr.bf16.mxu0 0
        %2077 = vmatpush1.bf16.msra.mxu0 0
        %2078 = vmatprep.subr.bf16.mxu0 0
        %2079 = vmatpush1.bf16.msra.mxu0 0
        %2080 = vmatprep.subr.bf16.mxu0 0
        %2081 = vmatpush1.bf16.msra.mxu0 0
        %2082 = vmatprep.subr.bf16.mxu0 0
        %2083 = vmatpush1.bf16.msra.mxu0 0
        %2084 = vmatprep.subr.bf16.mxu0 0
        %2085 = vmatpush1.bf16.msra.mxu0 0
        %2086 = vmatprep.subr.bf16.mxu0 0
        %2087 = vmatpush1.bf16.msra.mxu0 0
        %2088 = vmatprep.subr.bf16.mxu0 0
        %2089 = vmatpush1.bf16.msra.mxu0 0
        %2090 = vmatprep.mubr.bf16.mxu0 0
        %2091 = vmatmul.mubr.bf16.gmra.mrb[0].mxu0 %v2023
        %v2092 = vpop.f32.mrb[0].mxu0
        %v2093 = vadd.f32 0.0, %v2092
        %v2094 = vpop.f32.mrb[0].mxu0
        %v2095 = vpop.f32.mrb[0].mxu0
        %v2096 = vadd.f32 0.0, %v2095
        %v2097 = vpop.f32.mrb[0].mxu0
        %2098 = vmatprep.mubr.bf16.mxu0 0
        %2099 = vmatmul.mubr.bf16.gmra.mrb[0].mxu0 %v2026
        %v2100 = vpop.f32.mrb[0].mxu0
        %v2101 = vpop.f32.mrb[0].mxu0
        %v2102 = vpop.f32.mrb[0].mxu0
        %v2103 = vadd.f32 0.0, %v2102
        %v2104 = vpop.f32.mrb[0].mxu0
        %2105 = vmatprep.mubr.bf16.mxu0 0
        %2106 = vmatmul.mubr.bf16.gmra.mrb[0].mxu0 %v2029
        %v2107 = vpop.f32.mrb[0].mxu0
        %v2108 = vadd.f32 0.0, %v2107
        %v2109 = vpop.f32.mrb[0].mxu0
        %v2110 = vpop.f32.mrb[0].mxu0
        %v2111 = vpop.f32.mrb[0].mxu0
        %2112 = vmatprep.mubr.bf16.mxu0 0
        %2113 = vmatmul.mubr.bf16.gmra.mrb[0].mxu0 %v2032
        %v2114 = vpop.f32.mrb[0].mxu0
        %v2115 = vadd.f32 0.0, %v2114
        %v2116 = vpop.f32.mrb[0].mxu0
        %v2117 = vpop.f32.mrb[0].mxu0
        %v2118 = vadd.f32 0.0, %v2117
        %v2119 = vpop.f32.mrb[0].mxu0
        %2120 = vmatprep.mubr.bf16.mxu0 0
        %2121 = vmatmul.mubr.bf16.gmra.mrb[0].mxu0 %v2035
        %v2122 = vpop.f32.mrb[0].mxu0
        %v2123 = vpop.f32.mrb[0].mxu0
        %v2124 = vpop.f32.mrb[0].mxu0
        %v2125 = vadd.f32 0.0, %v2124
        %v2126 = vpop.f32.mrb[0].mxu0
        %2127 = vmatprep.mubr.bf16.mxu0 0
        %2128 = vmatmul.mubr.bf16.gmra.mrb[0].mxu0 %v2038
        %v2129 = vpop.f32.mrb[0].mxu0
        %v2130 = vadd.f32 0.0, %v2129
        %v2131 = vpop.f32.mrb[0].mxu0
        %v2132 = vpop.f32.mrb[0].mxu0
        %v2133 = vpop.f32.mrb[0].mxu0
        %2134 = vmatprep.mubr.bf16.mxu0 0
        %2135 = vmatmul.mubr.bf16.gmra.mrb[0].mxu0 %v2041
        %v2136 = vpop.f32.mrb[0].mxu0
        %v2137 = vadd.f32 0.0, %v2136
        %v2138 = vpop.f32.mrb[0].mxu0
        %v2139 = vpop.f32.mrb[0].mxu0
        %v2140 = vadd.f32 0.0, %v2139
        %v2141 = vpop.f32.mrb[0].mxu0
        %2142 = vmatprep.mubr.bf16.mxu0 0
        %2143 = vmatmul.mubr.bf16.gmra.mrb[0].mxu0 %v2044
        %v2144 = vpop.f32.mrb[0].mxu0
        %v2145 = vpop.f32.mrb[0].mxu0
        %v2146 = vpop.f32.mrb[0].mxu0
        %v2147 = vadd.f32 0.0, %v2146
        %v2148 = vpop.f32.mrb[0].mxu0
        %2149 = vmatprep.mubr.bf16.mxu0 0
        %2150 = vmatmul.mubr.bf16.gmra.mrb[0].mxu0 %v2047
        %v2151 = vpop.f32.mrb[0].mxu0
        %v2152 = vadd.f32 0.0, %v2151
        %v2153 = vpop.f32.mrb[0].mxu0
        %v2154 = vpop.f32.mrb[0].mxu0
        %v2155 = vpop.f32.mrb[0].mxu0
        %2156 = vmatprep.mubr.bf16.mxu0 0
        %2157 = vmatmul.mubr.bf16.gmra.mrb[0].mxu0 %v2050
        %v2158 = vpop.f32.mrb[0].mxu0
        %v2159 = vadd.f32 0.0, %v2158
        %v2160 = vpop.f32.mrb[0].mxu0
        %v2161 = vpop.f32.mrb[0].mxu0
        %v2162 = vadd.f32 0.0, %v2161
        %v2163 = vpop.f32.mrb[0].mxu0
        %2164 = vmatprep.mubr.bf16.mxu0 0
        %2165 = vmatmul.mubr.bf16.gmra.mrb[0].mxu0 %v2053
        %v2166 = vpop.f32.mrb[0].mxu0
        %v2167 = vpop.f32.mrb[0].mxu0
        %v2168 = vpop.f32.mrb[0].mxu0
        %v2169 = vadd.f32 0.0, %v2168
        %v2170 = vpop.f32.mrb[0].mxu0
        %2171 = vmatprep.mubr.bf16.mxu0 0
        %2172 = vmatmul.mubr.bf16.gmra.mrb[0].mxu0 %v2056
        %v2173 = vpop.f32.mrb[0].mxu0
        %v2174 = vadd.f32 0.0, %v2173
        %v2175 = vpop.f32.mrb[0].mxu0
        %v2176 = vpop.f32.mrb[0].mxu0
        %v2177 = vpop.f32.mrb[0].mxu0
        %2178 = vdwg.mxu0
        %v2179 = vadd.f32 %v1972, %v2093
        %v2180 = vadd.f32 %v1973, %v2096
        %v2181 = vadd.f32 %v1974, %v2103
        %v2182 = vadd.f32 %v1975, %v2108
        %v2183 = vadd.f32 %v1976, %v2115
        %v2184 = vadd.f32 %v1977, %v2118
        %v2185 = vadd.f32 %v1978, %v2125
        %v2186 = vadd.f32 %v1979, %v2130
        %v2187 = vadd.f32 %v1980, %v2137
        %v2188 = vadd.f32 %v1981, %v2140
        %v2189 = vadd.f32 %v1982, %v2147
        %v2190 = vadd.f32 %v1983, %v2152
        %v2191 = vadd.f32 %v1984, %v2159
        %v2192 = vadd.f32 %v1985, %v2162
        %v2193 = vadd.f32 %v1986, %v2169
        %v2194 = vadd.f32 %v1987, %v2174
        %s2195 = scalar_lea.vmem [#allocation8], 48
        %v2196 = vld [vmem:[%s2195] sm:$0xf]
        %v2197 = vld [vmem:[%s2195 + $0x4] sm:$0xf]
        %v2198 = vpack.c.b16 %v875, %v874
        %v2199 = vpack.c.b16 %v877, %v876
        %v2200 = vpack.c.b16 %v879, %v878
        %v2203 = vunpack.c.l.b16 %v2196
        %v2204 = vunpack.c.l.b16 %v2197
        %v2205 = vpack.c.b16 %v2204, %v2203
        %v2208 = vsel %vm1006, %v2198, 0
        %v2211 = vsel %vm1006, %v2199, 0
        %v2214 = vsel %vm1006, %v2200, 0
        %2216 = vmatprep.subr.bf16.mxu0 0
        %2217 = vmatpush1.bf16.msra.mxu0 %v2205
        %2218 = vmatprep.subr.bf16.mxu0 0
        %2219 = vmatpush1.bf16.msra.mxu0 0
        %2220 = vmatprep.subr.bf16.mxu0 0
        %2221 = vmatpush1.bf16.msra.mxu0 0
        %2222 = vmatprep.subr.bf16.mxu0 0
        %2223 = vmatpush1.bf16.msra.mxu0 0
        %2224 = vmatprep.subr.bf16.mxu0 0
        %2225 = vmatpush1.bf16.msra.mxu0 0
        %2226 = vmatprep.subr.bf16.mxu0 0
        %2227 = vmatpush1.bf16.msra.mxu0 0
        %2228 = vmatprep.subr.bf16.mxu0 0
        %2229 = vmatpush1.bf16.msra.mxu0 0
        %2230 = vmatprep.subr.bf16.mxu0 0
        %2231 = vmatpush1.bf16.msra.mxu0 0
        %2232 = vmatprep.subr.bf16.mxu0 0
        %2233 = vmatpush1.bf16.msra.mxu0 0
        %2234 = vmatprep.subr.bf16.mxu0 0
        %2235 = vmatpush1.bf16.msra.mxu0 0
        %2236 = vmatprep.subr.bf16.mxu0 0
        %2237 = vmatpush1.bf16.msra.mxu0 0
        %2238 = vmatprep.subr.bf16.mxu0 0
        %2239 = vmatpush1.bf16.msra.mxu0 0
        %2240 = vmatprep.subr.bf16.mxu0 0
        %2241 = vmatpush1.bf16.msra.mxu0 0
        %2242 = vmatprep.subr.bf16.mxu0 0
        %2243 = vmatpush1.bf16.msra.mxu0 0
        %2244 = vmatprep.subr.bf16.mxu0 0
        %2245 = vmatpush1.bf16.msra.mxu0 0
        %2246 = vmatprep.subr.bf16.mxu0 0
        %2247 = vmatpush1.bf16.msra.mxu0 0
        %2248 = vmatprep.mubr.bf16.mxu0 0
        %2249 = vmatmul.mubr.bf16.gmra.mrb[0].mxu0 %v1176
        %v2250 = vpop.f32.mrb[0].mxu0
        %v2251 = vadd.f32 0.0, %v2250
        %v2252 = vpop.f32.mrb[0].mxu0
        %v2253 = vpop.f32.mrb[0].mxu0
        %v2254 = vadd.f32 0.0, %v2253
        %v2255 = vpop.f32.mrb[0].mxu0
        %2256 = vmatprep.mubr.bf16.mxu0 0
        %2257 = vmatmul.mubr.bf16.gmra.mrb[0].mxu0 %v1178
        %v2258 = vpop.f32.mrb[0].mxu0
        %v2259 = vpop.f32.mrb[0].mxu0
        %v2260 = vpop.f32.mrb[0].mxu0
        %v2261 = vadd.f32 0.0, %v2260
        %v2262 = vpop.f32.mrb[0].mxu0
        %2263 = vmatprep.mubr.bf16.mxu0 0
        %2264 = vmatmul.mubr.bf16.gmra.mrb[0].mxu0 %v1180
        %v2265 = vpop.f32.mrb[0].mxu0
        %v2266 = vadd.f32 0.0, %v2265
        %v2267 = vpop.f32.mrb[0].mxu0
        %v2268 = vpop.f32.mrb[0].mxu0
        %v2269 = vpop.f32.mrb[0].mxu0
        %2270 = vmatprep.mubr.bf16.mxu0 0
        %2271 = vmatmul.mubr.bf16.gmra.mrb[0].mxu0 %v1182
        %v2272 = vpop.f32.mrb[0].mxu0
        %v2273 = vadd.f32 0.0, %v2272
        %v2274 = vpop.f32.mrb[0].mxu0
        %v2275 = vpop.f32.mrb[0].mxu0
        %v2276 = vadd.f32 0.0, %v2275
        %v2277 = vpop.f32.mrb[0].mxu0
        %2278 = vmatprep.mubr.bf16.mxu0 0
        %2279 = vmatmul.mubr.bf16.gmra.mrb[0].mxu0 %v1184
        %v2280 = vpop.f32.mrb[0].mxu0
        %v2281 = vpop.f32.mrb[0].mxu0
        %v2282 = vpop.f32.mrb[0].mxu0
        %v2283 = vadd.f32 0.0, %v2282
        %v2284 = vpop.f32.mrb[0].mxu0
        %2285 = vmatprep.mubr.bf16.mxu0 0
        %2286 = vmatmul.mubr.bf16.gmra.mrb[0].mxu0 %v1186
        %v2287 = vpop.f32.mrb[0].mxu0
        %v2288 = vadd.f32 0.0, %v2287
        %v2289 = vpop.f32.mrb[0].mxu0
        %v2290 = vpop.f32.mrb[0].mxu0
        %v2291 = vpop.f32.mrb[0].mxu0
        %2292 = vmatprep.mubr.bf16.mxu0 0
        %2293 = vmatmul.mubr.bf16.gmra.mrb[0].mxu0 %v1188
        %v2294 = vpop.f32.mrb[0].mxu0
        %v2295 = vadd.f32 0.0, %v2294
        %v2296 = vpop.f32.mrb[0].mxu0
        %v2297 = vpop.f32.mrb[0].mxu0
        %v2298 = vadd.f32 0.0, %v2297
        %v2299 = vpop.f32.mrb[0].mxu0
        %2300 = vmatprep.mubr.bf16.mxu0 0
        %2301 = vmatmul.mubr.bf16.gmra.mrb[0].mxu0 %v1190
        %v2302 = vpop.f32.mrb[0].mxu0
        %v2303 = vpop.f32.mrb[0].mxu0
        %v2304 = vpop.f32.mrb[0].mxu0
        %v2305 = vadd.f32 0.0, %v2304
        %v2306 = vpop.f32.mrb[0].mxu0
        %2307 = vmatprep.mubr.bf16.mxu0 0
        %2308 = vmatmul.mubr.bf16.gmra.mrb[0].mxu0 %v1192
        %v2309 = vpop.f32.mrb[0].mxu0
        %v2310 = vadd.f32 0.0, %v2309
        %v2311 = vpop.f32.mrb[0].mxu0
        %v2312 = vpop.f32.mrb[0].mxu0
        %v2313 = vpop.f32.mrb[0].mxu0
        %2314 = vmatprep.mubr.bf16.mxu0 0
        %2315 = vmatmul.mubr.bf16.gmra.mrb[0].mxu0 %v2208
        %v2316 = vpop.f32.mrb[0].mxu0
        %v2317 = vadd.f32 0.0, %v2316
        %v2318 = vpop.f32.mrb[0].mxu0
        %v2319 = vpop.f32.mrb[0].mxu0
        %v2320 = vadd.f32 0.0, %v2319
        %v2321 = vpop.f32.mrb[0].mxu0
        %2322 = vmatprep.mubr.bf16.mxu0 0
        %2323 = vmatmul.mubr.bf16.gmra.mrb[0].mxu0 %v2211
        %v2324 = vpop.f32.mrb[0].mxu0
        %v2325 = vpop.f32.mrb[0].mxu0
        %v2326 = vpop.f32.mrb[0].mxu0
        %v2327 = vadd.f32 0.0, %v2326
        %v2328 = vpop.f32.mrb[0].mxu0
        %2329 = vmatprep.mubr.bf16.mxu0 0
        %2330 = vmatmul.mubr.bf16.gmra.mrb[0].mxu0 %v2214
        %v2331 = vpop.f32.mrb[0].mxu0
        %v2332 = vadd.f32 0.0, %v2331
        %v2333 = vpop.f32.mrb[0].mxu0
        %v2334 = vpop.f32.mrb[0].mxu0
        %v2335 = vpop.f32.mrb[0].mxu0
        %2336 = vdwg.mxu0
        %v2337 = vadd.f32 %v2179, %v2251
        %v2338 = vadd.f32 %v2180, %v2254
        %v2339 = vadd.f32 %v2181, %v2261
        %v2340 = vadd.f32 %v2182, %v2266
        %v2341 = vadd.f32 %v2183, %v2273
        %v2342 = vadd.f32 %v2184, %v2276
        %v2343 = vadd.f32 %v2185, %v2283
        %v2344 = vadd.f32 %v2186, %v2288
        %v2345 = vadd.f32 %v2187, %v2295
        %v2346 = vadd.f32 %v2188, %v2298
        %v2347 = vadd.f32 %v2189, %v2305
        %v2348 = vadd.f32 %v2190, %v2310
        %v2349 = vadd.f32 %v2191, %v2317
        %v2350 = vadd.f32 %v2192, %v2320
        %v2351 = vadd.f32 %v2193, %v2327
        %v2352 = vadd.f32 %v2194, %v2332
        %s2353 = scalar_lea.vmem [#allocation8], 56
        %v2354 = vld [vmem:[%s2353] sm:$0xf]
        %v2355 = vld [vmem:[%s2353 + $0x4] sm:$0xf]
        %v2356 = vpack.c.b16 %v880, %v880
        %v2357 = vshll.u32 %v2198, 16
        %v2359 = vrot.slane %v2357, 1
        %v2360 = vsel %vm899, %v994, %v2359
        %v2361 = vshrl.u32 %v2198, 16
        %v2363 = vor.u32 %v2361, %v2359
        %v2364 = vshll.u32 %v2199, 16
        %v2366 = vrot.slane %v2364, 1
        %v2367 = vsel %vm899, %v2363, %v2366
        %v2368 = vshrl.u32 %v2199, 16
        %v2370 = vor.u32 %v2368, %v2366
        %v2371 = vshll.u32 %v2200, 16
        %v2373 = vrot.slane %v2371, 1
        %v2374 = vsel %vm899, %v2370, %v2373
        %v2375 = vshrl.u32 %v2200, 16
        %v2377 = vor.u32 %v2375, %v2373
        %v2379 = vshll.u32 %v2356, 16
        %v2381 = vrot.slane %v2379, 1
        %v2382 = vsel %vm899, %v2377, %v2381
        %v2385 = vunpack.c.l.b16 %v2354
        %v2386 = vunpack.c.l.b16 %v2355
        %v2387 = vpack.c.b16 %v2386, %v2385
        %v2390 = vsel %vm1006, %v2360, 0
        %v2393 = vsel %vm1006, %v2367, 0
        %v2396 = vsel %vm1006, %v2374, 0
        %v2399 = vsel %vm1006, %v2382, 0
        %2401 = vmatprep.subr.bf16.mxu0 0
        %2402 = vmatpush1.bf16.msra.mxu0 %v2387
        %2403 = vmatprep.subr.bf16.mxu0 0
        %2404 = vmatpush1.bf16.msra.mxu0 0
        %2405 = vmatprep.subr.bf16.mxu0 0
        %2406 = vmatpush1.bf16.msra.mxu0 0
        %2407 = vmatprep.subr.bf16.mxu0 0
        %2408 = vmatpush1.bf16.msra.mxu0 0
        %2409 = vmatprep.subr.bf16.mxu0 0
        %2410 = vmatpush1.bf16.msra.mxu0 0
        %2411 = vmatprep.subr.bf16.mxu0 0
        %2412 = vmatpush1.bf16.msra.mxu0 0
        %2413 = vmatprep.subr.bf16.mxu0 0
        %2414 = vmatpush1.bf16.msra.mxu0 0
        %2415 = vmatprep.subr.bf16.mxu0 0
        %2416 = vmatpush1.bf16.msra.mxu0 0
        %2417 = vmatprep.subr.bf16.mxu0 0
        %2418 = vmatpush1.bf16.msra.mxu0 0
        %2419 = vmatprep.subr.bf16.mxu0 0
        %2420 = vmatpush1.bf16.msra.mxu0 0
        %2421 = vmatprep.subr.bf16.mxu0 0
        %2422 = vmatpush1.bf16.msra.mxu0 0
        %2423 = vmatprep.subr.bf16.mxu0 0
        %2424 = vmatpush1.bf16.msra.mxu0 0
        %2425 = vmatprep.subr.bf16.mxu0 0
        %2426 = vmatpush1.bf16.msra.mxu0 0
        %2427 = vmatprep.subr.bf16.mxu0 0
        %2428 = vmatpush1.bf16.msra.mxu0 0
        %2429 = vmatprep.subr.bf16.mxu0 0
        %2430 = vmatpush1.bf16.msra.mxu0 0
        %2431 = vmatprep.subr.bf16.mxu0 0
        %2432 = vmatpush1.bf16.msra.mxu0 0
        %2433 = vmatprep.mubr.bf16.mxu0 0
        %2434 = vmatmul.mubr.bf16.gmra.mrb[0].mxu0 %v1017
        %v2435 = vpop.f32.mrb[0].mxu0
        %v2436 = vadd.f32 0.0, %v2435
        %v2437 = vpop.f32.mrb[0].mxu0
        %v2438 = vpop.f32.mrb[0].mxu0
        %v2439 = vadd.f32 0.0, %v2438
        %v2440 = vpop.f32.mrb[0].mxu0
        %2441 = vmatprep.mubr.bf16.mxu0 0
        %2442 = vmatmul.mubr.bf16.gmra.mrb[0].mxu0 %v1020
        %v2443 = vpop.f32.mrb[0].mxu0
        %v2444 = vpop.f32.mrb[0].mxu0
        %v2445 = vpop.f32.mrb[0].mxu0
        %v2446 = vadd.f32 0.0, %v2445
        %v2447 = vpop.f32.mrb[0].mxu0
        %2448 = vmatprep.mubr.bf16.mxu0 0
        %2449 = vmatmul.mubr.bf16.gmra.mrb[0].mxu0 %v1023
        %v2450 = vpop.f32.mrb[0].mxu0
        %v2451 = vadd.f32 0.0, %v2450
        %v2452 = vpop.f32.mrb[0].mxu0
        %v2453 = vpop.f32.mrb[0].mxu0
        %v2454 = vpop.f32.mrb[0].mxu0
        %2455 = vmatprep.mubr.bf16.mxu0 0
        %2456 = vmatmul.mubr.bf16.gmra.mrb[0].mxu0 %v1026
        %v2457 = vpop.f32.mrb[0].mxu0
        %v2458 = vadd.f32 0.0, %v2457
        %v2459 = vpop.f32.mrb[0].mxu0
        %v2460 = vpop.f32.mrb[0].mxu0
        %v2461 = vadd.f32 0.0, %v2460
        %v2462 = vpop.f32.mrb[0].mxu0
        %2463 = vmatprep.mubr.bf16.mxu0 0
        %2464 = vmatmul.mubr.bf16.gmra.mrb[0].mxu0 %v1029
        %v2465 = vpop.f32.mrb[0].mxu0
        %v2466 = vpop.f32.mrb[0].mxu0
        %v2467 = vpop.f32.mrb[0].mxu0
        %v2468 = vadd.f32 0.0, %v2467
        %v2469 = vpop.f32.mrb[0].mxu0
        %2470 = vmatprep.mubr.bf16.mxu0 0
        %2471 = vmatmul.mubr.bf16.gmra.mrb[0].mxu0 %v1032
        %v2472 = vpop.f32.mrb[0].mxu0
        %v2473 = vadd.f32 0.0, %v2472
        %v2474 = vpop.f32.mrb[0].mxu0
        %v2475 = vpop.f32.mrb[0].mxu0
        %v2476 = vpop.f32.mrb[0].mxu0
        %2477 = vmatprep.mubr.bf16.mxu0 0
        %2478 = vmatmul.mubr.bf16.gmra.mrb[0].mxu0 %v1035
        %v2479 = vpop.f32.mrb[0].mxu0
        %v2480 = vadd.f32 0.0, %v2479
        %v2481 = vpop.f32.mrb[0].mxu0
        %v2482 = vpop.f32.mrb[0].mxu0
        %v2483 = vadd.f32 0.0, %v2482
        %v2484 = vpop.f32.mrb[0].mxu0
        %2485 = vmatprep.mubr.bf16.mxu0 0
        %2486 = vmatmul.mubr.bf16.gmra.mrb[0].mxu0 %v1038
        %v2487 = vpop.f32.mrb[0].mxu0
        %v2488 = vpop.f32.mrb[0].mxu0
        %v2489 = vpop.f32.mrb[0].mxu0
        %v2490 = vadd.f32 0.0, %v2489
        %v2491 = vpop.f32.mrb[0].mxu0
        %2492 = vmatprep.mubr.bf16.mxu0 0
        %2493 = vmatmul.mubr.bf16.gmra.mrb[0].mxu0 %v2390
        %v2494 = vpop.f32.mrb[0].mxu0
        %v2495 = vadd.f32 0.0, %v2494
        %v2496 = vpop.f32.mrb[0].mxu0
        %v2497 = vpop.f32.mrb[0].mxu0
        %v2498 = vpop.f32.mrb[0].mxu0
        %2499 = vmatprep.mubr.bf16.mxu0 0
        %2500 = vmatmul.mubr.bf16.gmra.mrb[0].mxu0 %v2393
        %v2501 = vpop.f32.mrb[0].mxu0
        %v2502 = vadd.f32 0.0, %v2501
        %v2503 = vpop.f32.mrb[0].mxu0
        %v2504 = vpop.f32.mrb[0].mxu0
        %v2505 = vadd.f32 0.0, %v2504
        %v2506 = vpop.f32.mrb[0].mxu0
        %2507 = vmatprep.mubr.bf16.mxu0 0
        %2508 = vmatmul.mubr.bf16.gmra.mrb[0].mxu0 %v2396
        %v2509 = vpop.f32.mrb[0].mxu0
        %v2510 = vpop.f32.mrb[0].mxu0
        %v2511 = vpop.f32.mrb[0].mxu0
        %v2512 = vadd.f32 0.0, %v2511
        %v2513 = vpop.f32.mrb[0].mxu0
        %2514 = vmatprep.mubr.bf16.mxu0 0
        %2515 = vmatmul.mubr.bf16.gmra.mrb[0].mxu0 %v2399
        %v2516 = vpop.f32.mrb[0].mxu0
        %v2517 = vadd.f32 0.0, %v2516
        %v2518 = vpop.f32.mrb[0].mxu0
        %v2519 = vpop.f32.mrb[0].mxu0
        %v2520 = vpop.f32.mrb[0].mxu0
        %2521 = vdwg.mxu0
        %v2522 = vadd.f32 %v2337, %v2436
        %v2523 = vadd.f32 %v2338, %v2439
        %v2524 = vadd.f32 %v2339, %v2446
        %v2525 = vadd.f32 %v2340, %v2451
        %v2526 = vadd.f32 %v2341, %v2458
        %v2527 = vadd.f32 %v2342, %v2461
        %v2528 = vadd.f32 %v2343, %v2468
        %v2529 = vadd.f32 %v2344, %v2473
        %v2530 = vadd.f32 %v2345, %v2480
        %v2531 = vadd.f32 %v2346, %v2483
        %v2532 = vadd.f32 %v2347, %v2490
        %v2533 = vadd.f32 %v2348, %v2495
        %v2534 = vadd.f32 %v2349, %v2502
        %v2535 = vadd.f32 %v2350, %v2505
        %v2536 = vadd.f32 %v2351, %v2512
        %v2537 = vadd.f32 %v2352, %v2517
        %s2538 = scalar_lea.vmem [#allocation8], 64
        %v2539 = vld [vmem:[%s2538] sm:$0xf]
        %v2540 = vld [vmem:[%s2538 + $0x4] sm:$0xf]
        %v2541 = vrot.slane %v2198, 1
        %v2542 = vsel %vm1318, %v1340, %v2541
        %v2543 = vrot.slane %v2199, 1
        %v2544 = vsel %vm1318, %v2541, %v2543
        %v2545 = vrot.slane %v2200, 1
        %v2546 = vsel %vm1318, %v2543, %v2545
        %v2547 = vrot.slane %v2356, 1
        %v2548 = vsel %vm1318, %v2545, %v2547
        %v2551 = vunpack.c.l.b16 %v2539
        %v2552 = vunpack.c.l.b16 %v2540
        %v2553 = vpack.c.b16 %v2552, %v2551
        %v2556 = vsel %vm1006, %v2542, 0
        %v2559 = vsel %vm1006, %v2544, 0
        %v2562 = vsel %vm1006, %v2546, 0
        %v2565 = vsel %vm1006, %v2548, 0
        %2567 = vmatprep.subr.bf16.mxu0 0
        %2568 = vmatpush1.bf16.msra.mxu0 %v2553
        %2569 = vmatprep.subr.bf16.mxu0 0
        %2570 = vmatpush1.bf16.msra.mxu0 0
        %2571 = vmatprep.subr.bf16.mxu0 0
        %2572 = vmatpush1.bf16.msra.mxu0 0
        %2573 = vmatprep.subr.bf16.mxu0 0
        %2574 = vmatpush1.bf16.msra.mxu0 0
        %2575 = vmatprep.subr.bf16.mxu0 0
        %2576 = vmatpush1.bf16.msra.mxu0 0
        %2577 = vmatprep.subr.bf16.mxu0 0
        %2578 = vmatpush1.bf16.msra.mxu0 0
        %2579 = vmatprep.subr.bf16.mxu0 0
        %2580 = vmatpush1.bf16.msra.mxu0 0
        %2581 = vmatprep.subr.bf16.mxu0 0
        %2582 = vmatpush1.bf16.msra.mxu0 0
        %2583 = vmatprep.subr.bf16.mxu0 0
        %2584 = vmatpush1.bf16.msra.mxu0 0
        %2585 = vmatprep.subr.bf16.mxu0 0
        %2586 = vmatpush1.bf16.msra.mxu0 0
        %2587 = vmatprep.subr.bf16.mxu0 0
        %2588 = vmatpush1.bf16.msra.mxu0 0
        %2589 = vmatprep.subr.bf16.mxu0 0
        %2590 = vmatpush1.bf16.msra.mxu0 0
        %2591 = vmatprep.subr.bf16.mxu0 0
        %2592 = vmatpush1.bf16.msra.mxu0 0
        %2593 = vmatprep.subr.bf16.mxu0 0
        %2594 = vmatpush1.bf16.msra.mxu0 0
        %2595 = vmatprep.subr.bf16.mxu0 0
        %2596 = vmatpush1.bf16.msra.mxu0 0
        %2597 = vmatprep.subr.bf16.mxu0 0
        %2598 = vmatpush1.bf16.msra.mxu0 0
        %2599 = vmatprep.mubr.bf16.mxu0 0
        %2600 = vmatmul.mubr.bf16.gmra.mrb[0].mxu0 %v1360
        %v2601 = vpop.f32.mrb[0].mxu0
        %v2602 = vadd.f32 0.0, %v2601
        %v2603 = vpop.f32.mrb[0].mxu0
        %v2604 = vpop.f32.mrb[0].mxu0
        %v2605 = vadd.f32 0.0, %v2604
        %v2606 = vpop.f32.mrb[0].mxu0
        %2607 = vmatprep.mubr.bf16.mxu0 0
        %2608 = vmatmul.mubr.bf16.gmra.mrb[0].mxu0 %v1363
        %v2609 = vpop.f32.mrb[0].mxu0
        %v2610 = vpop.f32.mrb[0].mxu0
        %v2611 = vpop.f32.mrb[0].mxu0
        %v2612 = vadd.f32 0.0, %v2611
        %v2613 = vpop.f32.mrb[0].mxu0
        %2614 = vmatprep.mubr.bf16.mxu0 0
        %2615 = vmatmul.mubr.bf16.gmra.mrb[0].mxu0 %v1366
        %v2616 = vpop.f32.mrb[0].mxu0
        %v2617 = vadd.f32 0.0, %v2616
        %v2618 = vpop.f32.mrb[0].mxu0
        %v2619 = vpop.f32.mrb[0].mxu0
        %v2620 = vpop.f32.mrb[0].mxu0
        %2621 = vmatprep.mubr.bf16.mxu0 0
        %2622 = vmatmul.mubr.bf16.gmra.mrb[0].mxu0 %v1369
        %v2623 = vpop.f32.mrb[0].mxu0
        %v2624 = vadd.f32 0.0, %v2623
        %v2625 = vpop.f32.mrb[0].mxu0
        %v2626 = vpop.f32.mrb[0].mxu0
        %v2627 = vadd.f32 0.0, %v2626
        %v2628 = vpop.f32.mrb[0].mxu0
        %2629 = vmatprep.mubr.bf16.mxu0 0
        %2630 = vmatmul.mubr.bf16.gmra.mrb[0].mxu0 %v1372
        %v2631 = vpop.f32.mrb[0].mxu0
        %v2632 = vpop.f32.mrb[0].mxu0
        %v2633 = vpop.f32.mrb[0].mxu0
        %v2634 = vadd.f32 0.0, %v2633
        %v2635 = vpop.f32.mrb[0].mxu0
        %2636 = vmatprep.mubr.bf16.mxu0 0
        %2637 = vmatmul.mubr.bf16.gmra.mrb[0].mxu0 %v1375
        %v2638 = vpop.f32.mrb[0].mxu0
        %v2639 = vadd.f32 0.0, %v2638
        %v2640 = vpop.f32.mrb[0].mxu0
        %v2641 = vpop.f32.mrb[0].mxu0
        %v2642 = vpop.f32.mrb[0].mxu0
        %2643 = vmatprep.mubr.bf16.mxu0 0
        %2644 = vmatmul.mubr.bf16.gmra.mrb[0].mxu0 %v1378
        %v2645 = vpop.f32.mrb[0].mxu0
        %v2646 = vadd.f32 0.0, %v2645
        %v2647 = vpop.f32.mrb[0].mxu0
        %v2648 = vpop.f32.mrb[0].mxu0
        %v2649 = vadd.f32 0.0, %v2648
        %v2650 = vpop.f32.mrb[0].mxu0
        %2651 = vmatprep.mubr.bf16.mxu0 0
        %2652 = vmatmul.mubr.bf16.gmra.mrb[0].mxu0 %v1381
        %v2653 = vpop.f32.mrb[0].mxu0
        %v2654 = vpop.f32.mrb[0].mxu0
        %v2655 = vpop.f32.mrb[0].mxu0
        %v2656 = vadd.f32 0.0, %v2655
        %v2657 = vpop.f32.mrb[0].mxu0
        %2658 = vmatprep.mubr.bf16.mxu0 0
        %2659 = vmatmul.mubr.bf16.gmra.mrb[0].mxu0 %v2556
        %v2660 = vpop.f32.mrb[0].mxu0
        %v2661 = vadd.f32 0.0, %v2660
        %v2662 = vpop.f32.mrb[0].mxu0
        %v2663 = vpop.f32.mrb[0].mxu0
        %v2664 = vpop.f32.mrb[0].mxu0
        %2665 = vmatprep.mubr.bf16.mxu0 0
        %2666 = vmatmul.mubr.bf16.gmra.mrb[0].mxu0 %v2559
        %v2667 = vpop.f32.mrb[0].mxu0
        %v2668 = vadd.f32 0.0, %v2667
        %v2669 = vpop.f32.mrb[0].mxu0
        %v2670 = vpop.f32.mrb[0].mxu0
        %v2671 = vadd.f32 0.0, %v2670
        %v2672 = vpop.f32.mrb[0].mxu0
        %2673 = vmatprep.mubr.bf16.mxu0 0
        %2674 = vmatmul.mubr.bf16.gmra.mrb[0].mxu0 %v2562
        %v2675 = vpop.f32.mrb[0].mxu0
        %v2676 = vpop.f32.mrb[0].mxu0
        %v2677 = vpop.f32.mrb[0].mxu0
        %v2678 = vadd.f32 0.0, %v2677
        %v2679 = vpop.f32.mrb[0].mxu0
        %2680 = vmatprep.mubr.bf16.mxu0 0
        %2681 = vmatmul.mubr.bf16.gmra.mrb[0].mxu0 %v2565
        %v2682 = vpop.f32.mrb[0].mxu0
        %v2683 = vadd.f32 0.0, %v2682
        %v2684 = vpop.f32.mrb[0].mxu0
        %v2685 = vpop.f32.mrb[0].mxu0
        %v2686 = vpop.f32.mrb[0].mxu0
        %2687 = vdwg.mxu0
        %v2688 = vadd.f32 %v2522, %v2602
        %v2689 = vadd.f32 %v2523, %v2605
        %v2690 = vadd.f32 %v2524, %v2612
        %v2691 = vadd.f32 %v2525, %v2617
        %v2692 = vadd.f32 %v2526, %v2624
        %v2693 = vadd.f32 %v2527, %v2627
        %v2694 = vadd.f32 %v2528, %v2634
        %v2695 = vadd.f32 %v2529, %v2639
        %v2696 = vadd.f32 %v2530, %v2646
        %v2697 = vadd.f32 %v2531, %v2649
        %v2698 = vadd.f32 %v2532, %v2656
        %v2699 = vadd.f32 %v2533, %v2661
        %v2700 = vadd.f32 %v2534, %v2668
        %v2701 = vadd.f32 %v2535, %v2671
        %v2702 = vadd.f32 %v2536, %v2678
        %v2703 = vadd.f32 %v2537, %v2683
        %v2704 = vld [vmem:[%s6] sm:$0x1]
        %v2706 = vlaneseq
        %v2707 = vshrl.u32 %v2706, 7
        %v2708 = vsub.s32 0, %v2707
        %v2709 = vrot.slane %v2704, %v2708
        %v2711 = vadd.f32 %v2688, %v2709
        %v2712 = vadd.f32 %v2689, %v2709
        %v2713 = vadd.f32 %v2690, %v2709
        %v2714 = vadd.f32 %v2691, %v2709
        %v2715 = vadd.f32 %v2692, %v2709
        %v2716 = vadd.f32 %v2693, %v2709
        %v2717 = vadd.f32 %v2694, %v2709
        %v2718 = vadd.f32 %v2695, %v2709
        %v2719 = vadd.f32 %v2696, %v2709
        %v2720 = vadd.f32 %v2697, %v2709
        %v2721 = vadd.f32 %v2698, %v2709
        %v2722 = vadd.f32 %v2699, %v2709
        %v2723 = vadd.f32 %v2700, %v2709
        %v2724 = vadd.f32 %v2701, %v2709
        %v2725 = vadd.f32 %v2702, %v2709
        %v2726 = vadd.f32 %v2703, %v2709
        %v2727 = vmax.f32 %v2711, 0.0
        %v2728 = vmax.f32 %v2712, 0.0
        %v2729 = vmax.f32 %v2713, 0.0
        %v2730 = vmax.f32 %v2714, 0.0
        %v2731 = vmax.f32 %v2715, 0.0
        %v2732 = vmax.f32 %v2716, 0.0
        %v2733 = vmax.f32 %v2717, 0.0
        %v2734 = vmax.f32 %v2718, 0.0
        %v2735 = vmax.f32 %v2719, 0.0
        %v2736 = vmax.f32 %v2720, 0.0
        %v2737 = vmax.f32 %v2721, 0.0
        %v2738 = vmax.f32 %v2722, 0.0
        %v2739 = vmax.f32 %v2723, 0.0
        %v2740 = vmax.f32 %v2724, 0.0
        %v2741 = vmax.f32 %v2725, 0.0
        %v2742 = vmax.f32 %v2726, 0.0
        %v2743 = vpack.c.bf16 %v2728, %v2727
        %v2744 = vpack.c.bf16 %v2730, %v2729
        %v2745 = vpack.c.bf16 %v2732, %v2731
        %v2746 = vpack.c.bf16 %v2734, %v2733
        %v2747 = vpack.c.bf16 %v2736, %v2735
        %v2748 = vpack.c.bf16 %v2738, %v2737
        %v2749 = vpack.c.bf16 %v2740, %v2739
        %v2750 = vpack.c.bf16 %v2742, %v2741
        %v2751 = vld [vmem:[%s7] sm:$0xf]
        %v2752 = vld [vmem:[%s7 + $0x4] sm:$0xf]
        %v2753 = vld [vmem:[%s8] sm:$0x1]
        %v2755 = vlaneseq
        %v2756 = vshrl.u32 %v2755, 7
        %v2757 = vsub.s32 0, %v2756
        %v2758 = vrot.slane %v2753, %v2757
        %v2762 = vunpack.c.l.b16 %v2751
        %v2763 = vunpack.c.l.b16 %v2752
        %v2764 = vpack.c.b16 %v2763, %v2762
        %v2767 = vsel %vm1006, %v2743, 0
        %v2770 = vsel %vm1006, %v2744, 0
        %v2773 = vsel %vm1006, %v2745, 0
        %v2776 = vsel %vm1006, %v2746, 0
        %v2779 = vsel %vm1006, %v2747, 0
        %v2782 = vsel %vm1006, %v2748, 0
        %v2785 = vsel %vm1006, %v2749, 0
        %v2788 = vsel %vm1006, %v2750, 0
        %2790 = vmatprep.subr.bf16.mxu0 0
        %2791 = vmatpush1.bf16.msra.mxu0 %v2764
        %2792 = vmatprep.subr.bf16.mxu0 0
        %2793 = vmatpush1.bf16.msra.mxu0 0
        %2794 = vmatprep.subr.bf16.mxu0 0
        %2795 = vmatpush1.bf16.msra.mxu0 0
        %2796 = vmatprep.subr.bf16.mxu0 0
        %2797 = vmatpush1.bf16.msra.mxu0 0
        %2798 = vmatprep.subr.bf16.mxu0 0
        %2799 = vmatpush1.bf16.msra.mxu0 0
        %2800 = vmatprep.subr.bf16.mxu0 0
        %2801 = vmatpush1.bf16.msra.mxu0 0
        %2802 = vmatprep.subr.bf16.mxu0 0
        %2803 = vmatpush1.bf16.msra.mxu0 0
        %2804 = vmatprep.subr.bf16.mxu0 0
        %2805 = vmatpush1.bf16.msra.mxu0 0
        %2806 = vmatprep.subr.bf16.mxu0 0
        %2807 = vmatpush1.bf16.msra.mxu0 0
        %2808 = vmatprep.subr.bf16.mxu0 0
        %2809 = vmatpush1.bf16.msra.mxu0 0
        %2810 = vmatprep.subr.bf16.mxu0 0
        %2811 = vmatpush1.bf16.msra.mxu0 0
        %2812 = vmatprep.subr.bf16.mxu0 0
        %2813 = vmatpush1.bf16.msra.mxu0 0
        %2814 = vmatprep.subr.bf16.mxu0 0
        %2815 = vmatpush1.bf16.msra.mxu0 0
        %2816 = vmatprep.subr.bf16.mxu0 0
        %2817 = vmatpush1.bf16.msra.mxu0 0
        %2818 = vmatprep.subr.bf16.mxu0 0
        %2819 = vmatpush1.bf16.msra.mxu0 0
        %2820 = vmatprep.subr.bf16.mxu0 0
        %2821 = vmatpush1.bf16.msra.mxu0 0
        %2822 = vmatprep.mubr.bf16.mxu0 0
        %2823 = vmatmul.mubr.bf16.gmra.mrb[0].mxu0 %v2767
        %v2824 = vpop.f32.mrb[0].mxu0
        %v2825 = vadd.f32 %v2758, %v2824
        %v2826 = vpop.f32.mrb[0].mxu0
        %v2827 = vpop.f32.mrb[0].mxu0
        %v2828 = vadd.f32 %v2758, %v2827
        %v2829 = vpop.f32.mrb[0].mxu0
        %2830 = vmatprep.mubr.bf16.mxu0 0
        %2831 = vmatmul.mubr.bf16.gmra.mrb[0].mxu0 %v2770
        %v2832 = vpop.f32.mrb[0].mxu0
        %v2833 = vadd.f32 %v2758, %v2832
        %v2834 = vpop.f32.mrb[0].mxu0
        %v2835 = vpop.f32.mrb[0].mxu0
        %v2836 = vadd.f32 %v2758, %v2835
        %v2837 = vpop.f32.mrb[0].mxu0
        %2838 = vmatprep.mubr.bf16.mxu0 0
        %2839 = vmatmul.mubr.bf16.gmra.mrb[0].mxu0 %v2773
        %v2840 = vpop.f32.mrb[0].mxu0
        %v2841 = vadd.f32 %v2758, %v2840
        %v2842 = vpop.f32.mrb[0].mxu0
        %v2843 = vpop.f32.mrb[0].mxu0
        %v2844 = vadd.f32 %v2758, %v2843
        %v2845 = vpop.f32.mrb[0].mxu0
        %2846 = vmatprep.mubr.bf16.mxu0 0
        %2847 = vmatmul.mubr.bf16.gmra.mrb[0].mxu0 %v2776
        %v2848 = vpop.f32.mrb[0].mxu0
        %v2849 = vadd.f32 %v2758, %v2848
        %v2850 = vpop.f32.mrb[0].mxu0
        %v2851 = vpop.f32.mrb[0].mxu0
        %v2852 = vadd.f32 %v2758, %v2851
        %v2853 = vpop.f32.mrb[0].mxu0
        %2854 = vmatprep.mubr.bf16.mxu0 0
        %2855 = vmatmul.mubr.bf16.gmra.mrb[0].mxu0 %v2779
        %v2856 = vpop.f32.mrb[0].mxu0
        %v2857 = vadd.f32 %v2758, %v2856
        %v2858 = vpop.f32.mrb[0].mxu0
        %v2859 = vpop.f32.mrb[0].mxu0
        %v2860 = vadd.f32 %v2758, %v2859
        %v2861 = vpop.f32.mrb[0].mxu0
        %2862 = vmatprep.mubr.bf16.mxu0 0
        %2863 = vmatmul.mubr.bf16.gmra.mrb[0].mxu0 %v2782
        %v2864 = vpop.f32.mrb[0].mxu0
        %v2865 = vadd.f32 %v2758, %v2864
        %v2866 = vpop.f32.mrb[0].mxu0
        %v2867 = vpop.f32.mrb[0].mxu0
        %v2868 = vadd.f32 %v2758, %v2867
        %v2869 = vpop.f32.mrb[0].mxu0
        %2870 = vmatprep.mubr.bf16.mxu0 0
        %2871 = vmatmul.mubr.bf16.gmra.mrb[0].mxu0 %v2785
        %v2872 = vpop.f32.mrb[0].mxu0
        %v2873 = vadd.f32 %v2758, %v2872
        %v2874 = vpop.f32.mrb[0].mxu0
        %v2875 = vpop.f32.mrb[0].mxu0
        %v2876 = vadd.f32 %v2758, %v2875
        %v2877 = vpop.f32.mrb[0].mxu0
        %2878 = vmatprep.mubr.bf16.mxu0 0
        %2879 = vmatmul.mubr.bf16.gmra.mrb[0].mxu0 %v2788
        %v2880 = vpop.f32.mrb[0].mxu0
        %v2881 = vadd.f32 %v2758, %v2880
        %v2882 = vpop.f32.mrb[0].mxu0
        %v2883 = vpop.f32.mrb[0].mxu0
        %v2884 = vadd.f32 %v2758, %v2883
        %v2885 = vpop.f32.mrb[0].mxu0
        %2886 = vdwg.mxu0
        %v2887 = vadd.f32 %v2825, %v473
        %v2888 = vadd.f32 %v2828, %v474
        %v2889 = vadd.f32 %v2833, %v475
        %v2890 = vadd.f32 %v2836, %v476
        %v2891 = vadd.f32 %v2841, %v477
        %v2892 = vadd.f32 %v2844, %v478
        %v2893 = vadd.f32 %v2849, %v479
        %v2894 = vadd.f32 %v2852, %v480
        %v2895 = vadd.f32 %v2857, %v481
        %v2896 = vadd.f32 %v2860, %v482
        %v2897 = vadd.f32 %v2865, %v483
        %v2898 = vadd.f32 %v2868, %v484
        %v2899 = vadd.f32 %v2873, %v485
        %v2900 = vadd.f32 %v2876, %v486
        %v2901 = vadd.f32 %v2881, %v487
        %v2902 = vadd.f32 %v2884, %v488
        %v2903 = vmax.f32 %v2887, 0.0
        %v2904 = vmax.f32 %v2888, 0.0
        %v2905 = vmax.f32 %v2889, 0.0
        %v2906 = vmax.f32 %v2890, 0.0
        %v2907 = vmax.f32 %v2891, 0.0
        %v2908 = vmax.f32 %v2892, 0.0
        %v2909 = vmax.f32 %v2893, 0.0
        %v2910 = vmax.f32 %v2894, 0.0
        %v2911 = vmax.f32 %v2895, 0.0
        %v2912 = vmax.f32 %v2896, 0.0
        %v2913 = vmax.f32 %v2897, 0.0
        %v2914 = vmax.f32 %v2898, 0.0
        %v2915 = vmax.f32 %v2899, 0.0
        %v2916 = vmax.f32 %v2900, 0.0
        %v2917 = vmax.f32 %v2901, 0.0
        %v2918 = vmax.f32 %v2902, 0.0
        %2919 = vst.msk [vmem:[%s469] sm:$0xff] %vm542, %v2903
        %2920 = vst.msk [vmem:[%s469 + $0x8] sm:$0xff] %vm542, %v2904
        %2921 = vst.msk [vmem:[%s469 + $0x10] sm:$0xff] %vm542, %v2905
        %2922 = vst.msk [vmem:[%s469 + $0x18] sm:$0xff] %vm542, %v2906
        %2923 = vst.msk [vmem:[%s469 + $0x20] sm:$0xff] %vm542, %v2907
        %2924 = vst.msk [vmem:[%s469 + $0x28] sm:$0xff] %vm542, %v2908
        %2925 = vst.msk [vmem:[%s469 + $0x30] sm:$0xff] %vm542, %v2909
        %2926 = vst.msk [vmem:[%s469 + $0x38] sm:$0xff] %vm542, %v2910
        %2927 = vst.msk [vmem:[%s469 + $0x40] sm:$0xff] %vm542, %v2911
        %2928 = vst.msk [vmem:[%s469 + $0x48] sm:$0xff] %vm542, %v2912
        %2929 = vst.msk [vmem:[%s469 + $0x50] sm:$0xff] %vm542, %v2913
        %2930 = vst.msk [vmem:[%s469 + $0x58] sm:$0xff] %vm542, %v2914
        %2931 = vst.msk [vmem:[%s469 + $0x60] sm:$0xff] %vm542, %v2915
        %2932 = vst.msk [vmem:[%s469 + $0x68] sm:$0xff] %vm542, %v2916
        %2933 = vst.msk [vmem:[%s469 + $0x70] sm:$0xff] %vm542, %v2917
        %2934 = vst.msk [vmem:[%s469 + $0x78] sm:$0xff] %vm542, %v2918
        %s2935 = sand.u32 %s262, 1
        %s2936 = scalar_lea.sflag [#allocation4], %s2935
        %s2937 = sand.u32 %s262, 1
        %s2938 = smul.addr %s2937, 128
        %s2939 = scalar_lea.vmem [#allocation10], %s2938
        // Predicated region
        $region73: #{tpu_custom_call.1} parent=55 // pred_check
          %p2940 = pneg %p272
        $region74: #{tpu_custom_call.1} parent=55 // pred_check_branch
          %2942 = sbr.rel (%p2940) target = $region76
        $region75: #{tpu_custom_call.1} parent=55 // pred_region
          %s2943 = smul.u32 8, %s35
          %s2945 = ssub.s32 2048, 2048
          %2946 = vsyncadd %s2936, %s2945
          %s2947 = smul.addr %s2943, 2
          %s2948 = smul.addr %s34, 32
          %s2949 = sadd.s32 %s2947, %s2948
          %s2950 = smul.addr %s2949, 128
          %s2951 = scalar_lea.hbm %s9, %s2950
          %s2952 = sshll.u32 %s2939, 4
          %s2953 = int_to_ptr.vmem [resolvable:$true] %s2952
          %2958 = dma.vmem_to_hbm [thread:$0]  %s2953, 2048, %s2951, %s2936, 128, 128, 8
        $region76: #{tpu_custom_call.1} parent=55 // pred_fallthru
          _
      $region56: #{tpu_custom_call.1} parent=5 // pred_fallthru
        _
      %p2959 = scmp.le.s32.totalorder 2, %s25
      // Predicated region
      $region77: #{tpu_custom_call.1} parent=5 // pred_check
        %p2960 = pneg %p2959
      $region78: #{tpu_custom_call.1} parent=5 // pred_check_branch
        %2962 = sbr.rel (%p2960) target = $region80
      $region79: #{tpu_custom_call.1} parent=5 // pred_region
        %s2963 = ssub.s32 %s25, 2
        // Predicated region
        $region81: #{tpu_custom_call.1} parent=79 // pred_check
          %p2964 = pneg %p278
        $region82: #{tpu_custom_call.1} parent=79 // pred_check_branch
          %2966 = sbr.rel (%p2964) target = $region84
        $region83: #{tpu_custom_call.1} parent=79 // pred_region
          %s2967 = sand.u32 %s263, 1
          %s2968 = scalar_lea.sflag [#allocation4], %s2967
          %s2969 = sand.u32 %s263, 1
          %s2970 = smul.addr %s2969, 128
          %s2971 = scalar_lea.vmem [#allocation10], %s2970
          %2972 = dma.done %s2968, 2048
        $region84: #{tpu_custom_call.1} parent=79 // pred_fallthru
          _
      $region80: #{tpu_custom_call.1} parent=5 // pred_fallthru
        _
    $region6: #{tpu_custom_call.1} parent=1 // loop_footer
      %s29 = sadd.s32 1, %s25
    $region7: #{tpu_custom_call.1} parent=1 // loop_footer_branch
      %24 = sbr.rel target = $region3
    $region8: #{tpu_custom_call.1} parent=1 // loop_exit
      _
    %2973 = vsyncpa [#allocation3], 1
    %s2974 = scalar_lea.sflag [#allocation3], 1
    %2975 = vsyncpa %s2974, 1
    %2976 = vsyncpa [#allocation6], 1
    %s2977 = scalar_lea.sflag [#allocation6], 1
    %2978 = vsyncpa %s2977, 1
    %2979 = vsyncpa [#allocation9], 1
    %2980 = vsyncpa [#allocation4], 1
    %s2981 = scalar_lea.sflag [#allocation4], 1
    %2982 = vsyncpa %s2981, 1

</llo_original>
